<compile_context>
chip_gen: v5e
topology: v5e:2x2
jax: 0.10.0
libtpu: 0.0.40
codegen_flags: <defaults>
</compile_context>

<pallas_src>
import math
from functools import partial

import jax
import jax.numpy as jnp
from jax.experimental import pallas as pl
from jax.experimental.pallas import tpu as pltpu


_NET_ORDER = ("t1", "s1", "t2", "s2")


# ----------------------------- Pallas kernel ---------------------------------
def realnvp_fwd_kernel(x_ref,
                       w1a_ref, b1a_ref, w2a_ref, b2a_ref, w3a_ref, b3a_ref,
                       w1b_ref, b1b_ref, w2b_ref, b2b_ref, w3b_ref, b3b_ref,
                       z_ref, logdet_ref, *, d):
    """x_ref: (dim, Bt).  Each coupling layer uses ONE packed MLP whose output
    rows are [t ; s].  Weights may be bf16 (MXU inputs); biases / elementwise
    math stay f32."""

    def fused_mlp(x_f32, w1, b1, w2, b2, w3, b3):
        mm_dtype = w1.dtype
        h = jnp.dot(w1[...], x_f32.astype(mm_dtype),
                    preferred_element_type=jnp.float32) + b1[...]
        h = jnp.tanh(h)
        h = jnp.dot(w2[...], h.astype(mm_dtype),
                    preferred_element_type=jnp.float32) + b2[...]
        h = jnp.tanh(h)
        out = jnp.dot(w3[...], h.astype(mm_dtype),
                      preferred_element_type=jnp.float32) + b3[...]
        return out[0:d, :], out[d:, :]          # (t, s), each (d, Bt) f32

    x = x_ref[...]                               # (dim, Bt) f32
    lower = x[0:d, :]
    upper = x[d:, :]

    # Coupling layer 1: transform upper conditioned on lower.
    t1, s1 = fused_mlp(lower, w1a_ref, b1a_ref, w2a_ref, b2a_ref, w3a_ref, b3a_ref)
    upper_new = t1 + upper * jnp.exp(s1)

    # Coupling layer 2: transform lower conditioned on (new) upper.
    t2, s2 = fused_mlp(upper_new, w1b_ref, b1b_ref, w2b_ref, b2b_ref, w3b_ref, b3b_ref)
    lower_new = t2 + lower * jnp.exp(s2)

    # z = concat([lower, upper], feature axis) as two lane-dense sublane stores.
    z_ref[0:d, :] = lower_new.astype(z_ref.dtype)
    z_ref[d:, :] = upper_new.astype(z_ref.dtype)
    logdet_ref[...] = (jnp.sum(s1, axis=0, keepdims=True)
                       + jnp.sum(s2, axis=0, keepdims=True)).astype(logdet_ref.dtype)


# --------------------------- host-side packing --------------------------------
def _block_diag(a, b):
    out = jnp.zeros((a.shape[0] + b.shape[0], a.shape[1] + b.shape[1]), a.dtype)
    out = out.at[:a.shape[0], :a.shape[1]].set(a)
    out = out.at[a.shape[0]:, a.shape[1]:].set(b)
    return out


def _pack_coupling_params(t_p, s_p, matmul_dtype):
    """Pack a (t, s) pair of 3-layer FCNNs into one MLP: layer-1 weights are
    stacked (same input), layers 2/3 are block-diagonal.  Weights are cast to
    the MXU input dtype; biases stay f32."""
    w1 = jnp.concatenate([t_p["w1"], s_p["w1"]], axis=0).astype(matmul_dtype)
    b1 = jnp.concatenate([t_p["b1"], s_p["b1"]], axis=0).astype(jnp.float32)
    w2 = _block_diag(t_p["w2"], s_p["w2"]).astype(matmul_dtype)
    b2 = jnp.concatenate([t_p["b2"], s_p["b2"]], axis=0).astype(jnp.float32)
    w3 = _block_diag(t_p["w3"], s_p["w3"]).astype(matmul_dtype)
    b3 = jnp.concatenate([t_p["b3"], s_p["b3"]], axis=0).astype(jnp.float32)
    return [w1, b1, w2, b2, w3, b3]


def realnvp_forward(x, params, *, batch_tile=512, matmul_dtype=jnp.bfloat16):
    """x: (B, dim) f32.  params: {"t1","s1","t2","s2"} -> FCNN param dicts.
    Returns (z, log_det) with z: (B, dim), log_det: (B,)."""
    B, dim = x.shape
    d = dim // 2
    assert dim == 2 * d, "RealNVP requires an even feature dimension"
    assert batch_tile % 128 == 0, "keep the lane (batch) axis 128-aligned"

    # Pad batch to a tile multiple and put batch on the lane axis (single
    # fused pad+transpose; tail columns compute discarded garbage).
    Bp = ((B + batch_tile - 1) // batch_tile) * batch_tile
    x_T = x.T
    if Bp != B:
        x_T = jnp.pad(x_T, ((0, 0), (0, Bp - B)))

    flat_w = (_pack_coupling_params(params["t1"], params["s1"], matmul_dtype)
              + _pack_coupling_params(params["t2"], params["s2"], matmul_dtype))

    grid = (Bp // batch_tile,)
    in_specs = (
        [pl.BlockSpec((dim, batch_tile), lambda i: (0, i))]
        # Packed weights/biases: full blocks with constant index_map ->
        # VMEM-resident for the whole grid, no re-DMA between steps.
        + [pl.BlockSpec(w.shape, lambda i: (0, 0)) for w in flat_w]
    )
    out_specs = (
        pl.BlockSpec((dim, batch_tile), lambda i: (0, i)),
        pl.BlockSpec((1, batch_tile), lambda i: (0, i)),
    )
    out_shape = (
        jax.ShapeDtypeStruct((dim, Bp), jnp.float32),
        jax.ShapeDtypeStruct((1, Bp), jnp.float32),
    )

    z_T, logdet = pl.pallas_call(
        partial(realnvp_fwd_kernel, d=d),
        out_shape=out_shape,
        grid_spec=pltpu.PrefetchScalarGridSpec(
            num_scalar_prefetch=0,
            grid=grid,
            in_specs=in_specs,
            out_specs=out_specs,
        ),
        compiler_params=pltpu.CompilerParams(
            dimension_semantics=("parallel",),
        ),
    )(x_T, *flat_w)

    z = z_T.T[:B]              # (B, dim)
    log_det = logdet[0, :B]    # (B,)
    return z, log_det


# ------------------------------ init helpers ----------------------------------
def init_fcnn_params(key, in_dim, out_dim, hidden_dim):
    """PyTorch nn.Linear-style init, weights kept in native (out, in)
    orientation; biases are (out, 1) columns (broadcast over the lane axis)."""
    def linear(k, fan_in, fan_out):
        kw, kb = jax.random.split(k)
        bound = 1.0 / math.sqrt(fan_in)
        w = jax.random.uniform(kw, (fan_out, fan_in), jnp.float32, -bound, bound)
        b = jax.random.uniform(kb, (fan_out, 1), jnp.float32, -bound, bound)
        return w, b

    k1, k2, k3 = jax.random.split(key, 3)
    w1, b1 = linear(k1, in_dim, hidden_dim)
    w2, b2 = linear(k2, hidden_dim, hidden_dim)
    w3, b3 = linear(k3, hidden_dim, out_dim)
    return {"w1": w1, "b1": b1, "w2": w2, "b2": b2, "w3": w3, "b3": b3}


def init_realnvp_params(key, dim, hidden_dim):
    d = dim // 2
    keys = jax.random.split(key, 4)
    return {net: init_fcnn_params(k, d, d, hidden_dim)
            for net, k in zip(_NET_ORDER, keys)}


# ---------------- pure-JAX reference (mirrors the PyTorch module) --------------
def _mlp_ref(x, p):
    h = jnp.tanh(x @ p["w1"].T + p["b1"].T)
    h = jnp.tanh(h @ p["w2"].T + p["b2"].T)
    return h @ p["w3"].T + p["b3"].T


def realnvp_reference(x, params):
    d = x.shape[1] // 2
    lower, upper = x[:, :d], x[:, d:]
    t1 = _mlp_ref(lower, params["t1"])
    s1 = _mlp_ref(lower, params["s1"])
    upper = t1 + upper * jnp.exp(s1)
    t2 = _mlp_ref(upper, params["t2"])
    s2 = _mlp_ref(upper, params["s2"])
    lower = t2 + lower * jnp.exp(s2)
    z = jnp.concatenate([lower, upper], axis=1)
    log_det = jnp.sum(s1, axis=1) + jnp.sum(s2, axis=1)
    return z, log_det


if __name__ == "__main__":
    key = jax.random.PRNGKey(0)
    k_x, k_p = jax.random.split(key)

    dim, hidden_dim = 8, 32        # small coupling nets (RealNVP style)
    B, batch_tile = 1024, 512      # lane-dense tiles; grid=(2,), both v7x cores

    x = jax.random.normal(k_x, (B, dim), dtype=jnp.float32)
    params = init_realnvp_params(k_p, dim, hidden_dim)

    z_ref, ld_ref = realnvp_reference(x, params)

    # 1) Exact-semantics check: f32 MXU path vs the pure-JAX reference (tight).
    z32, ld32 = realnvp_forward(x, params, batch_tile=batch_tile,
                                matmul_dtype=jnp.float32)
    z32 = jax.block_until_ready(z32)
    assert z32.shape == (B, dim) and ld32.shape == (B,)
    assert jnp.allclose(z32, z_ref, atol=1e-4, rtol=1e-4)
    assert jnp.allclose(ld32, ld_ref, atol=1e-4, rtol=1e-4)

    # 2) Fast path: bf16 MXU inputs with f32 accumulation / elementwise
    #    (tolerance loosened for the bf16 input rounding, per the review).
    z, log_det = realnvp_forward(x, params, batch_tile=batch_tile,
                                 matmul_dtype=jnp.bfloat16)
    z = jax.block_until_ready(z)
    log_det = jax.block_until_ready(log_det)
    assert z.shape == (B, dim) and log_det.shape == (B,)
    assert jnp.allclose(z, z_ref, atol=1e-1, rtol=5e-2)
    assert jnp.allclose(log_det, ld_ref, atol=1.5e-1, rtol=5e-2)

    print("KERNEL_OK")
</pallas_src>

<mosaic_0001>
module attributes {stable_mosaic.version = 11 : i64} {
  func.func @realnvp_fwd_kernel(%arg0: i32, %arg1: memref<8x512xf32, #tpu.memory_space<vmem>>, %arg2: memref<64x4xf32, #tpu.memory_space<vmem>>, %arg3: memref<64x1xf32, #tpu.memory_space<vmem>>, %arg4: memref<64x64xf32, #tpu.memory_space<vmem>>, %arg5: memref<64x1xf32, #tpu.memory_space<vmem>>, %arg6: memref<8x64xf32, #tpu.memory_space<vmem>>, %arg7: memref<8x1xf32, #tpu.memory_space<vmem>>, %arg8: memref<64x4xf32, #tpu.memory_space<vmem>>, %arg9: memref<64x1xf32, #tpu.memory_space<vmem>>, %arg10: memref<64x64xf32, #tpu.memory_space<vmem>>, %arg11: memref<64x1xf32, #tpu.memory_space<vmem>>, %arg12: memref<8x64xf32, #tpu.memory_space<vmem>>, %arg13: memref<8x1xf32, #tpu.memory_space<vmem>>, %arg14: memref<8x512xf32, #tpu.memory_space<vmem>>, %arg15: memref<1x512xf32, #tpu.memory_space<vmem>>) attributes {dimension_semantics = [#tpu.dimension_semantics<parallel>], iteration_bounds = array<i64: 2>, scalar_prefetch = 0 : i64, scratch_operands = 0 : i64, tpu.core_type = #tpu.core_type<tc>, window_params = [{transform_indices = @transform_0, window_bounds = array<i64: 8, 512>}, {pipeline_mode = #tpu.pipeline_mode<synchronous>, transform_indices = @transform_1, window_bounds = array<i64: 64, 4>}, {pipeline_mode = #tpu.pipeline_mode<synchronous>, transform_indices = @transform_2, window_bounds = array<i64: 64, 1>}, {pipeline_mode = #tpu.pipeline_mode<synchronous>, transform_indices = @transform_3, window_bounds = array<i64: 64, 64>}, {pipeline_mode = #tpu.pipeline_mode<synchronous>, transform_indices = @transform_4, window_bounds = array<i64: 64, 1>}, {pipeline_mode = #tpu.pipeline_mode<synchronous>, transform_indices = @transform_5, window_bounds = array<i64: 8, 64>}, {pipeline_mode = #tpu.pipeline_mode<synchronous>, transform_indices = @transform_6, window_bounds = array<i64: 8, 1>}, {pipeline_mode = #tpu.pipeline_mode<synchronous>, transform_indices = @transform_7, window_bounds = array<i64: 64, 4>}, {pipeline_mode = #tpu.pipeline_mode<synchronous>, transform_indices = @transform_8, window_bounds = array<i64: 64, 1>}, {pipeline_mode = #tpu.pipeline_mode<synchronous>, transform_indices = @transform_9, window_bounds = array<i64: 64, 64>}, {pipeline_mode = #tpu.pipeline_mode<synchronous>, transform_indices = @transform_10, window_bounds = array<i64: 64, 1>}, {pipeline_mode = #tpu.pipeline_mode<synchronous>, transform_indices = @transform_11, window_bounds = array<i64: 8, 64>}, {pipeline_mode = #tpu.pipeline_mode<synchronous>, transform_indices = @transform_12, window_bounds = array<i64: 8, 1>}, {transform_indices = @transform_13, window_bounds = array<i64: 8, 512>}, {transform_indices = @transform_14, window_bounds = array<i64: 1, 512>}]} {
    %c0 = arith.constant 0 : index
    %c0_0 = arith.constant 0 : index
    %0 = vector.load %arg1[%c0, %c0_0] : memref<8x512xf32, #tpu.memory_space<vmem>>, vector<8x512xf32>
    %1 = vector.extract_strided_slice %0 {offsets = [0, 0], sizes = [4, 512], strides = [1, 1]} : vector<8x512xf32> to vector<4x512xf32>
    %2 = vector.extract_strided_slice %0 {offsets = [4, 0], sizes = [4, 512], strides = [1, 1]} : vector<8x512xf32> to vector<4x512xf32>
    %c0_1 = arith.constant 0 : index
    %c0_2 = arith.constant 0 : index
    %3 = vector.load %arg2[%c0_1, %c0_2] : memref<64x4xf32, #tpu.memory_space<vmem>>, vector<64x4xf32>
    %cst = arith.constant dense<0.000000e+00> : vector<64x512xf32>
    %4 = tpu.matmul %3, %1, %cst {dimension_numbers = #tpu.dot_dimension_numbers<[1], [0], [0], [1], [0, 0, 1, 1], [], []>} : vector<64x4xf32>, vector<4x512xf32>, vector<64x512xf32> -> vector<64x512xf32>
    %c0_3 = arith.constant 0 : index
    %c0_4 = arith.constant 0 : index
    %5 = vector.load %arg3[%c0_3, %c0_4] : memref<64x1xf32, #tpu.memory_space<vmem>>, vector<64x1xf32>
    %6 = vector.broadcast %5 : vector<64x1xf32> to vector<64x512xf32>
    %7 = arith.addf %4, %6 : vector<64x512xf32>
    %8 = math.tanh %7 : vector<64x512xf32>
    %c0_5 = arith.constant 0 : index
    %c0_6 = arith.constant 0 : index
    %9 = vector.load %arg4[%c0_5, %c0_6] : memref<64x64xf32, #tpu.memory_space<vmem>>, vector<64x64xf32>
    %cst_7 = arith.constant dense<0.000000e+00> : vector<64x512xf32>
    %10 = tpu.matmul %9, %8, %cst_7 {dimension_numbers = #tpu.dot_dimension_numbers<[1], [0], [0], [1], [0, 0, 1, 1], [], []>} : vector<64x64xf32>, vector<64x512xf32>, vector<64x512xf32> -> vector<64x512xf32>
    %c0_8 = arith.constant 0 : index
    %c0_9 = arith.constant 0 : index
    %11 = vector.load %arg5[%c0_8, %c0_9] : memref<64x1xf32, #tpu.memory_space<vmem>>, vector<64x1xf32>
    %12 = vector.broadcast %11 : vector<64x1xf32> to vector<64x512xf32>
    %13 = arith.addf %10, %12 : vector<64x512xf32>
    %14 = math.tanh %13 : vector<64x512xf32>
    %c0_10 = arith.constant 0 : index
    %c0_11 = arith.constant 0 : index
    %15 = vector.load %arg6[%c0_10, %c0_11] : memref<8x64xf32, #tpu.memory_space<vmem>>, vector<8x64xf32>
    %cst_12 = arith.constant dense<0.000000e+00> : vector<8x512xf32>
    %16 = tpu.matmul %15, %14, %cst_12 {dimension_numbers = #tpu.dot_dimension_numbers<[1], [0], [0], [1], [0, 0, 1, 1], [], []>} : vector<8x64xf32>, vector<64x512xf32>, vector<8x512xf32> -> vector<8x512xf32>
    %c0_13 = arith.constant 0 : index
    %c0_14 = arith.constant 0 : index
    %17 = vector.load %arg7[%c0_13, %c0_14] : memref<8x1xf32, #tpu.memory_space<vmem>>, vector<8x1xf32>
    %18 = vector.broadcast %17 : vector<8x1xf32> to vector<8x512xf32>
    %19 = arith.addf %16, %18 : vector<8x512xf32>
    %20 = vector.extract_strided_slice %19 {offsets = [0, 0], sizes = [4, 512], strides = [1, 1]} : vector<8x512xf32> to vector<4x512xf32>
    %21 = vector.extract_strided_slice %19 {offsets = [4, 0], sizes = [4, 512], strides = [1, 1]} : vector<8x512xf32> to vector<4x512xf32>
    %22 = math.exp %21 : vector<4x512xf32>
    %23 = arith.mulf %2, %22 : vector<4x512xf32>
    %24 = arith.addf %20, %23 : vector<4x512xf32>
    %c0_15 = arith.constant 0 : index
    %c0_16 = arith.constant 0 : index
    %25 = vector.load %arg8[%c0_15, %c0_16] : memref<64x4xf32, #tpu.memory_space<vmem>>, vector<64x4xf32>
    %cst_17 = arith.constant dense<0.000000e+00> : vector<64x512xf32>
    %26 = tpu.matmul %25, %24, %cst_17 {dimension_numbers = #tpu.dot_dimension_numbers<[1], [0], [0], [1], [0, 0, 1, 1], [], []>} : vector<64x4xf32>, vector<4x512xf32>, vector<64x512xf32> -> vector<64x512xf32>
    %c0_18 = arith.constant 0 : index
    %c0_19 = arith.constant 0 : index
    %27 = vector.load %arg9[%c0_18, %c0_19] : memref<64x1xf32, #tpu.memory_space<vmem>>, vector<64x1xf32>
    %28 = vector.broadcast %27 : vector<64x1xf32> to vector<64x512xf32>
    %29 = arith.addf %26, %28 : vector<64x512xf32>
    %30 = math.tanh %29 : vector<64x512xf32>
    %c0_20 = arith.constant 0 : index
    %c0_21 = arith.constant 0 : index
    %31 = vector.load %arg10[%c0_20, %c0_21] : memref<64x64xf32, #tpu.memory_space<vmem>>, vector<64x64xf32>
    %cst_22 = arith.constant dense<0.000000e+00> : vector<64x512xf32>
    %32 = tpu.matmul %31, %30, %cst_22 {dimension_numbers = #tpu.dot_dimension_numbers<[1], [0], [0], [1], [0, 0, 1, 1], [], []>} : vector<64x64xf32>, vector<64x512xf32>, vector<64x512xf32> -> vector<64x512xf32>
    %c0_23 = arith.constant 0 : index
    %c0_24 = arith.constant 0 : index
    %33 = vector.load %arg11[%c0_23, %c0_24] : memref<64x1xf32, #tpu.memory_space<vmem>>, vector<64x1xf32>
    %34 = vector.broadcast %33 : vector<64x1xf32> to vector<64x512xf32>
    %35 = arith.addf %32, %34 : vector<64x512xf32>
    %36 = math.tanh %35 : vector<64x512xf32>
    %c0_25 = arith.constant 0 : index
    %c0_26 = arith.constant 0 : index
    %37 = vector.load %arg12[%c0_25, %c0_26] : memref<8x64xf32, #tpu.memory_space<vmem>>, vector<8x64xf32>
    %cst_27 = arith.constant dense<0.000000e+00> : vector<8x512xf32>
    %38 = tpu.matmul %37, %36, %cst_27 {dimension_numbers = #tpu.dot_dimension_numbers<[1], [0], [0], [1], [0, 0, 1, 1], [], []>} : vector<8x64xf32>, vector<64x512xf32>, vector<8x512xf32> -> vector<8x512xf32>
    %c0_28 = arith.constant 0 : index
    %c0_29 = arith.constant 0 : index
    %39 = vector.load %arg13[%c0_28, %c0_29] : memref<8x1xf32, #tpu.memory_space<vmem>>, vector<8x1xf32>
    %40 = vector.broadcast %39 : vector<8x1xf32> to vector<8x512xf32>
    %41 = arith.addf %38, %40 : vector<8x512xf32>
    %42 = vector.extract_strided_slice %41 {offsets = [0, 0], sizes = [4, 512], strides = [1, 1]} : vector<8x512xf32> to vector<4x512xf32>
    %43 = vector.extract_strided_slice %41 {offsets = [4, 0], sizes = [4, 512], strides = [1, 1]} : vector<8x512xf32> to vector<4x512xf32>
    %44 = math.exp %43 : vector<4x512xf32>
    %45 = arith.mulf %1, %44 : vector<4x512xf32>
    %46 = arith.addf %42, %45 : vector<4x512xf32>
    %c0_30 = arith.constant 0 : index
    %c0_31 = arith.constant 0 : index
    %47 = vector.load %arg14[%c0_30, %c0_31] : memref<8x512xf32, #tpu.memory_space<vmem>>, vector<4x512xf32>
    tpu.vector_store %arg14[%c0_30, %c0_31], %46 {strides = array<i32>} : memref<8x512xf32, #tpu.memory_space<vmem>>, vector<4x512xf32>,
    %c4 = arith.constant 4 : index
    %c0_32 = arith.constant 0 : index
    %48 = vector.load %arg14[%c4, %c0_32] : memref<8x512xf32, #tpu.memory_space<vmem>>, vector<4x512xf32>
    tpu.vector_store %arg14[%c4, %c0_32], %24 {strides = array<i32>} : memref<8x512xf32, #tpu.memory_space<vmem>>, vector<4x512xf32>,
    %cst_33 = arith.constant dense<0.000000e+00> : vector<512xf32>
    %49 = vector.multi_reduction <add>, %21, %cst_33 [0] : vector<4x512xf32> to vector<512xf32>
    %50 = vector.shape_cast %49 : vector<512xf32> to vector<1x512xf32>
    %cst_34 = arith.constant dense<0.000000e+00> : vector<512xf32>
    %51 = vector.multi_reduction <add>, %43, %cst_34 [0] : vector<4x512xf32> to vector<512xf32>
    %52 = vector.shape_cast %51 : vector<512xf32> to vector<1x512xf32>
    %53 = arith.addf %50, %52 : vector<1x512xf32>
    %c0_35 = arith.constant 0 : index
    %c0_36 = arith.constant 0 : index
    %54 = vector.load %arg15[%c0_35, %c0_36] : memref<1x512xf32, #tpu.memory_space<vmem>>, vector<1x512xf32>
    tpu.vector_store %arg15[%c0_35, %c0_36], %53 {strides = array<i32>} : memref<1x512xf32, #tpu.memory_space<vmem>>, vector<1x512xf32>,
    return
  }
  func.func @transform_0(%arg0: i32) -> (i32, i32) {
    %c0_i32 = arith.constant 0 : i32
    %c0_i32_0 = arith.constant 0 : i32
    return %c0_i32, %arg0 : i32, i32
  }
  func.func @transform_1(%arg0: i32) -> (i32, i32) {
    %c0_i32 = arith.constant 0 : i32
    %c0_i32_0 = arith.constant 0 : i32
    %c0_i32_1 = arith.constant 0 : i32
    return %c0_i32, %c0_i32_0 : i32, i32
  }
  func.func @transform_2(%arg0: i32) -> (i32, i32) {
    %c0_i32 = arith.constant 0 : i32
    %c0_i32_0 = arith.constant 0 : i32
    %c0_i32_1 = arith.constant 0 : i32
    return %c0_i32, %c0_i32_0 : i32, i32
  }
  func.func @transform_3(%arg0: i32) -> (i32, i32) {
    %c0_i32 = arith.constant 0 : i32
    %c0_i32_0 = arith.constant 0 : i32
    %c0_i32_1 = arith.constant 0 : i32
    return %c0_i32, %c0_i32_0 : i32, i32
  }
  func.func @transform_4(%arg0: i32) -> (i32, i32) {
    %c0_i32 = arith.constant 0 : i32
    %c0_i32_0 = arith.constant 0 : i32
    %c0_i32_1 = arith.constant 0 : i32
    return %c0_i32, %c0_i32_0 : i32, i32
  }
  func.func @transform_5(%arg0: i32) -> (i32, i32) {
    %c0_i32 = arith.constant 0 : i32
    %c0_i32_0 = arith.constant 0 : i32
    %c0_i32_1 = arith.constant 0 : i32
    return %c0_i32, %c0_i32_0 : i32, i32
  }
  func.func @transform_6(%arg0: i32) -> (i32, i32) {
    %c0_i32 = arith.constant 0 : i32
    %c0_i32_0 = arith.constant 0 : i32
    %c0_i32_1 = arith.constant 0 : i32
    return %c0_i32, %c0_i32_0 : i32, i32
  }
  func.func @transform_7(%arg0: i32) -> (i32, i32) {
    %c0_i32 = arith.constant 0 : i32
    %c0_i32_0 = arith.constant 0 : i32
    %c0_i32_1 = arith.constant 0 : i32
    return %c0_i32, %c0_i32_0 : i32, i32
  }
  func.func @transform_8(%arg0: i32) -> (i32, i32) {
    %c0_i32 = arith.constant 0 : i32
    %c0_i32_0 = arith.constant 0 : i32
    %c0_i32_1 = arith.constant 0 : i32
    return %c0_i32, %c0_i32_0 : i32, i32
  }
  func.func @transform_9(%arg0: i32) -> (i32, i32) {
    %c0_i32 = arith.constant 0 : i32
    %c0_i32_0 = arith.constant 0 : i32
    %c0_i32_1 = arith.constant 0 : i32
    return %c0_i32, %c0_i32_0 : i32, i32
  }
  func.func @transform_10(%arg0: i32) -> (i32, i32) {
    %c0_i32 = arith.constant 0 : i32
    %c0_i32_0 = arith.constant 0 : i32
    %c0_i32_1 = arith.constant 0 : i32
    return %c0_i32, %c0_i32_0 : i32, i32
  }
  func.func @transform_11(%arg0: i32) -> (i32, i32) {
    %c0_i32 = arith.constant 0 : i32
    %c0_i32_0 = arith.constant 0 : i32
    %c0_i32_1 = arith.constant 0 : i32
    return %c0_i32, %c0_i32_0 : i32, i32
  }
  func.func @transform_12(%arg0: i32) -> (i32, i32) {
    %c0_i32 = arith.constant 0 : i32
    %c0_i32_0 = arith.constant 0 : i32
    %c0_i32_1 = arith.constant 0 : i32
    return %c0_i32, %c0_i32_0 : i32, i32
  }
  func.func @transform_13(%arg0: i32) -> (i32, i32) {
    %c0_i32 = arith.constant 0 : i32
    %c0_i32_0 = arith.constant 0 : i32
    return %c0_i32, %arg0 : i32, i32
  }
  func.func @transform_14(%arg0: i32) -> (i32, i32) {
    %c0_i32 = arith.constant 0 : i32
    %c0_i32_0 = arith.constant 0 : i32
    return %c0_i32, %arg0 : i32, i32
  }
}

</mosaic_0001>

<llo_original>
// kernel: tpu_custom_call.1
$region0: #{tpu_custom_call.1}
  #allocation0 [shape = 'u32[]', space=smem, size = 0x4, offset = 0x4, fixed_abs, tag = 'smem constant byte address 0x4 - core index']
  #allocation1 [shape = 'u32[72,128]{1,0:T(1,128)}', space=vmem, size = 0x9000, scoped, tag = 'internal scratch']
  %s0 = inlined_call_operand.vmem [shape: f32[8,1024], index: 0, kind: input, shape index: {}]
  %s1 = inlined_call_operand.vmem [shape: f32[64,4], index: 1, kind: input, shape index: {}]
  %s2 = inlined_call_operand.vmem [shape: f32[64,1], index: 2, kind: input, shape index: {}]
  %s3 = inlined_call_operand.vmem [shape: f32[64,64], index: 3, kind: input, shape index: {}]
  %s4 = inlined_call_operand.vmem [shape: f32[64,1], index: 4, kind: input, shape index: {}]
  %s5 = inlined_call_operand.vmem [shape: f32[8,64], index: 5, kind: input, shape index: {}]
  %s6 = inlined_call_operand.vmem [shape: f32[8,1], index: 6, kind: input, shape index: {}]
  %s7 = inlined_call_operand.vmem [shape: f32[64,4], index: 7, kind: input, shape index: {}]
  %s8 = inlined_call_operand.vmem [shape: f32[64,1], index: 8, kind: input, shape index: {}]
  %s9 = inlined_call_operand.vmem [shape: f32[64,64], index: 9, kind: input, shape index: {}]
  %s10 = inlined_call_operand.vmem [shape: f32[64,1], index: 10, kind: input, shape index: {}]
  %s11 = inlined_call_operand.vmem [shape: f32[8,64], index: 11, kind: input, shape index: {}]
  %s12 = inlined_call_operand.vmem [shape: f32[8,1], index: 12, kind: input, shape index: {}]
  %s13 = inlined_call_operand.hbm [shape: f32[8,1024], index: 13, kind: output, shape index: {0}]
  %s14 = inlined_call_operand.hbm [shape: f32[1,1024], index: 14, kind: output, shape index: {1}]
  %15 = xla_tuple %s13, %s14
  %s16 = sld [smem:[#allocation0]]
  $region93: #{tpu_custom_call.1} parent=0
    _
  %s18 = ssub.s32 1, %s16
  %s19 = scalar_select 0, %s18, %s16
  $region1: #{tpu_custom_call.1} parent=0
    #allocation2 [shape = 'u8[32768]{0}', space=vmem, size = 0x8000, scoped, tag = 'output window, operand 0']
    #allocation3 [shape = 's32[2]{0}', space=sflag, size = 0x8, scoped, tag = 'scoped memory for tpu_custom_call.1']
    #allocation4 [shape = 'u8[4096]{0}', space=vmem, size = 0x1000, scoped, tag = 'output window, operand 1']
    #allocation5 [shape = 's32[2]{0}', space=sflag, size = 0x8, scoped, tag = 'scoped memory for tpu_custom_call.1']
    %20 = vsyncpa [#allocation3], 0
    %s21 = scalar_lea.sflag [#allocation3], 1
    %22 = vsyncpa %s21, 0
    %23 = vsyncpa [#allocation5], 0
    %s24 = scalar_lea.sflag [#allocation5], 1
    %25 = vsyncpa %s24, 0
    loop: start=0, step=1, limit=4
    $region2: #{tpu_custom_call.1} parent=1 // loop_pre_header
      _
    $region3: #{tpu_custom_call.1} parent=1 // loop_header
      %s27 = sphi 0, %s31
      %p28 = scmp.ge.s32.totalorder %s27, 4
      %s37 = sphi 0, %s39
      %s40 = sphi 0, %s37
      %s41 = sphi 0, %s40
      %s57 = sphi 0, %s41
      %s61 = sphi 0, %s61
      %s63 = sphi 0, %s61
      %s64 = sphi 0, %s63
      %s78 = sphi 0, %s64
      %s82 = sphi 0, %s82
      %s84 = sphi 0, %s82
      %s85 = sphi 0, %s84
      %s99 = sphi 0, %s85
      %s103 = sphi 0, %s103
      %s105 = sphi 0, %s103
      %s106 = sphi 0, %s105
      %s120 = sphi 0, %s106
      %s124 = sphi 0, %s124
      %s126 = sphi 0, %s124
      %s127 = sphi 0, %s126
      %s141 = sphi 0, %s127
      %s145 = sphi 0, %s145
      %s147 = sphi 0, %s145
      %s148 = sphi 0, %s147
      %s162 = sphi 0, %s148
      %s166 = sphi 0, %s166
      %s168 = sphi 0, %s166
      %s169 = sphi 0, %s168
      %s183 = sphi 0, %s169
      %s187 = sphi 0, %s187
      %s189 = sphi 0, %s187
      %s190 = sphi 0, %s189
      %s204 = sphi 0, %s190
      %s208 = sphi 0, %s208
      %s210 = sphi 0, %s208
      %s211 = sphi 0, %s210
      %s225 = sphi 0, %s211
      %s229 = sphi 0, %s229
      %s231 = sphi 0, %s229
      %s232 = sphi 0, %s231
      %s246 = sphi 0, %s232
      %s250 = sphi 0, %s250
      %s252 = sphi 0, %s250
      %s253 = sphi 0, %s252
      %s267 = sphi 0, %s253
      %s271 = sphi 0, %s271
      %s273 = sphi 0, %s271
      %s274 = sphi 0, %s273
      %s288 = sphi 0, %s274
      %s292 = sphi 0, %s292
      %s294 = sphi 0, %s292
      %s295 = sphi 0, %s294
      %s309 = sphi 0, %s295
      %s315 = sphi 0, %s317
      %s318 = sphi 0, %s315
      %s319 = sphi 0, %s318
      %s335 = sphi 0, %s319
      %s341 = sphi 0, %s343
      %s344 = sphi 0, %s341
      %s345 = sphi 0, %s344
      %s361 = sphi 0, %s345
    $region4: #{tpu_custom_call.1} parent=1 // loop_header_branch
      %30 = sbr.rel (%p28) target = $region8
    $region5: #{tpu_custom_call.1} parent=1 // loop_body
      %s32 = ssub.s32 %s27, 1
      %s33 = ssub.s32 %s27, 2
      %s34 = sadd.s32 %s27, 1
      %s35 = ssub.s32 %s27, %s34
      %p36 = scmp.eq.s32.totalorder %s35, 0
      %s38 = sadd.s32 %s37, 1
      %s39 = scalar_select %p36, %s37, %s38
      %p42 = pneg %p36
      %p43 = scmp.eq.s32.totalorder %s27, 1
      %p44 = por %p42, %p43
      %p45 = scmp.ne.s32.totalorder %s37, %s40
      %p46 = scmp.eq.s32.totalorder %s27, 0
      %p47 = por %p45, %p46
      %p48 = scmp.ne.s32.totalorder %s37, %s40
      %p49 = scmp.eq.s32.totalorder %s32, 1
      %p50 = por %p48, %p49
      %p51 = scmp.ne.s32.totalorder %s40, %s41
      %p52 = scmp.eq.s32.totalorder %s32, 0
      %p53 = por %p51, %p52
      %p54 = scmp.ne.s32.totalorder %s40, %s41
      %p55 = scmp.eq.s32.totalorder %s33, 1
      %p56 = por %p54, %p55
      %p58 = scmp.ne.s32.totalorder %s41, %s57
      %p59 = scmp.eq.s32.totalorder %s33, 0
      %p60 = por %p58, %p59
      %s62 = sadd.s32 %s61, 1
      %p65 = scmp.eq.s32.totalorder %s27, 1
      %p66 = scmp.ne.s32.totalorder %s61, %s63
      %p67 = scmp.eq.s32.totalorder %s27, 0
      %p68 = por %p66, %p67
      %p69 = scmp.ne.s32.totalorder %s61, %s63
      %p70 = scmp.eq.s32.totalorder %s32, 1
      %p71 = por %p69, %p70
      %p72 = scmp.ne.s32.totalorder %s63, %s64
      %p73 = scmp.eq.s32.totalorder %s32, 0
      %p74 = por %p72, %p73
      %p75 = scmp.ne.s32.totalorder %s63, %s64
      %p76 = scmp.eq.s32.totalorder %s33, 1
      %p77 = por %p75, %p76
      %p79 = scmp.ne.s32.totalorder %s64, %s78
      %p80 = scmp.eq.s32.totalorder %s33, 0
      %p81 = por %p79, %p80
      %s83 = sadd.s32 %s82, 1
      %p86 = scmp.eq.s32.totalorder %s27, 1
      %p87 = scmp.ne.s32.totalorder %s82, %s84
      %p88 = scmp.eq.s32.totalorder %s27, 0
      %p89 = por %p87, %p88
      %p90 = scmp.ne.s32.totalorder %s82, %s84
      %p91 = scmp.eq.s32.totalorder %s32, 1
      %p92 = por %p90, %p91
      %p93 = scmp.ne.s32.totalorder %s84, %s85
      %p94 = scmp.eq.s32.totalorder %s32, 0
      %p95 = por %p93, %p94
      %p96 = scmp.ne.s32.totalorder %s84, %s85
      %p97 = scmp.eq.s32.totalorder %s33, 1
      %p98 = por %p96, %p97
      %p100 = scmp.ne.s32.totalorder %s85, %s99
      %p101 = scmp.eq.s32.totalorder %s33, 0
      %p102 = por %p100, %p101
      %s104 = sadd.s32 %s103, 1
      %p107 = scmp.eq.s32.totalorder %s27, 1
      %p108 = scmp.ne.s32.totalorder %s103, %s105
      %p109 = scmp.eq.s32.totalorder %s27, 0
      %p110 = por %p108, %p109
      %p111 = scmp.ne.s32.totalorder %s103, %s105
      %p112 = scmp.eq.s32.totalorder %s32, 1
      %p113 = por %p111, %p112
      %p114 = scmp.ne.s32.totalorder %s105, %s106
      %p115 = scmp.eq.s32.totalorder %s32, 0
      %p116 = por %p114, %p115
      %p117 = scmp.ne.s32.totalorder %s105, %s106
      %p118 = scmp.eq.s32.totalorder %s33, 1
      %p119 = por %p117, %p118
      %p121 = scmp.ne.s32.totalorder %s106, %s120
      %p122 = scmp.eq.s32.totalorder %s33, 0
      %p123 = por %p121, %p122
      %s125 = sadd.s32 %s124, 1
      %p128 = scmp.eq.s32.totalorder %s27, 1
      %p129 = scmp.ne.s32.totalorder %s124, %s126
      %p130 = scmp.eq.s32.totalorder %s27, 0
      %p131 = por %p129, %p130
      %p132 = scmp.ne.s32.totalorder %s124, %s126
      %p133 = scmp.eq.s32.totalorder %s32, 1
      %p134 = por %p132, %p133
      %p135 = scmp.ne.s32.totalorder %s126, %s127
      %p136 = scmp.eq.s32.totalorder %s32, 0
      %p137 = por %p135, %p136
      %p138 = scmp.ne.s32.totalorder %s126, %s127
      %p139 = scmp.eq.s32.totalorder %s33, 1
      %p140 = por %p138, %p139
      %p142 = scmp.ne.s32.totalorder %s127, %s141
      %p143 = scmp.eq.s32.totalorder %s33, 0
      %p144 = por %p142, %p143
      %s146 = sadd.s32 %s145, 1
      %p149 = scmp.eq.s32.totalorder %s27, 1
      %p150 = scmp.ne.s32.totalorder %s145, %s147
      %p151 = scmp.eq.s32.totalorder %s27, 0
      %p152 = por %p150, %p151
      %p153 = scmp.ne.s32.totalorder %s145, %s147
      %p154 = scmp.eq.s32.totalorder %s32, 1
      %p155 = por %p153, %p154
      %p156 = scmp.ne.s32.totalorder %s147, %s148
      %p157 = scmp.eq.s32.totalorder %s32, 0
      %p158 = por %p156, %p157
      %p159 = scmp.ne.s32.totalorder %s147, %s148
      %p160 = scmp.eq.s32.totalorder %s33, 1
      %p161 = por %p159, %p160
      %p163 = scmp.ne.s32.totalorder %s148, %s162
      %p164 = scmp.eq.s32.totalorder %s33, 0
      %p165 = por %p163, %p164
      %s167 = sadd.s32 %s166, 1
      %p170 = scmp.eq.s32.totalorder %s27, 1
      %p171 = scmp.ne.s32.totalorder %s166, %s168
      %p172 = scmp.eq.s32.totalorder %s27, 0
      %p173 = por %p171, %p172
      %p174 = scmp.ne.s32.totalorder %s166, %s168
      %p175 = scmp.eq.s32.totalorder %s32, 1
      %p176 = por %p174, %p175
      %p177 = scmp.ne.s32.totalorder %s168, %s169
      %p178 = scmp.eq.s32.totalorder %s32, 0
      %p179 = por %p177, %p178
      %p180 = scmp.ne.s32.totalorder %s168, %s169
      %p181 = scmp.eq.s32.totalorder %s33, 1
      %p182 = por %p180, %p181
      %p184 = scmp.ne.s32.totalorder %s169, %s183
      %p185 = scmp.eq.s32.totalorder %s33, 0
      %p186 = por %p184, %p185
      %s188 = sadd.s32 %s187, 1
      %p191 = scmp.eq.s32.totalorder %s27, 1
      %p192 = scmp.ne.s32.totalorder %s187, %s189
      %p193 = scmp.eq.s32.totalorder %s27, 0
      %p194 = por %p192, %p193
      %p195 = scmp.ne.s32.totalorder %s187, %s189
      %p196 = scmp.eq.s32.totalorder %s32, 1
      %p197 = por %p195, %p196
      %p198 = scmp.ne.s32.totalorder %s189, %s190
      %p199 = scmp.eq.s32.totalorder %s32, 0
      %p200 = por %p198, %p199
      %p201 = scmp.ne.s32.totalorder %s189, %s190
      %p202 = scmp.eq.s32.totalorder %s33, 1
      %p203 = por %p201, %p202
      %p205 = scmp.ne.s32.totalorder %s190, %s204
      %p206 = scmp.eq.s32.totalorder %s33, 0
      %p207 = por %p205, %p206
      %s209 = sadd.s32 %s208, 1
      %p212 = scmp.eq.s32.totalorder %s27, 1
      %p213 = scmp.ne.s32.totalorder %s208, %s210
      %p214 = scmp.eq.s32.totalorder %s27, 0
      %p215 = por %p213, %p214
      %p216 = scmp.ne.s32.totalorder %s208, %s210
      %p217 = scmp.eq.s32.totalorder %s32, 1
      %p218 = por %p216, %p217
      %p219 = scmp.ne.s32.totalorder %s210, %s211
      %p220 = scmp.eq.s32.totalorder %s32, 0
      %p221 = por %p219, %p220
      %p222 = scmp.ne.s32.totalorder %s210, %s211
      %p223 = scmp.eq.s32.totalorder %s33, 1
      %p224 = por %p222, %p223
      %p226 = scmp.ne.s32.totalorder %s211, %s225
      %p227 = scmp.eq.s32.totalorder %s33, 0
      %p228 = por %p226, %p227
      %s230 = sadd.s32 %s229, 1
      %p233 = scmp.eq.s32.totalorder %s27, 1
      %p234 = scmp.ne.s32.totalorder %s229, %s231
      %p235 = scmp.eq.s32.totalorder %s27, 0
      %p236 = por %p234, %p235
      %p237 = scmp.ne.s32.totalorder %s229, %s231
      %p238 = scmp.eq.s32.totalorder %s32, 1
      %p239 = por %p237, %p238
      %p240 = scmp.ne.s32.totalorder %s231, %s232
      %p241 = scmp.eq.s32.totalorder %s32, 0
      %p242 = por %p240, %p241
      %p243 = scmp.ne.s32.totalorder %s231, %s232
      %p244 = scmp.eq.s32.totalorder %s33, 1
      %p245 = por %p243, %p244
      %p247 = scmp.ne.s32.totalorder %s232, %s246
      %p248 = scmp.eq.s32.totalorder %s33, 0
      %p249 = por %p247, %p248
      %s251 = sadd.s32 %s250, 1
      %p254 = scmp.eq.s32.totalorder %s27, 1
      %p255 = scmp.ne.s32.totalorder %s250, %s252
      %p256 = scmp.eq.s32.totalorder %s27, 0
      %p257 = por %p255, %p256
      %p258 = scmp.ne.s32.totalorder %s250, %s252
      %p259 = scmp.eq.s32.totalorder %s32, 1
      %p260 = por %p258, %p259
      %p261 = scmp.ne.s32.totalorder %s252, %s253
      %p262 = scmp.eq.s32.totalorder %s32, 0
      %p263 = por %p261, %p262
      %p264 = scmp.ne.s32.totalorder %s252, %s253
      %p265 = scmp.eq.s32.totalorder %s33, 1
      %p266 = por %p264, %p265
      %p268 = scmp.ne.s32.totalorder %s253, %s267
      %p269 = scmp.eq.s32.totalorder %s33, 0
      %p270 = por %p268, %p269
      %s272 = sadd.s32 %s271, 1
      %p275 = scmp.eq.s32.totalorder %s27, 1
      %p276 = scmp.ne.s32.totalorder %s271, %s273
      %p277 = scmp.eq.s32.totalorder %s27, 0
      %p278 = por %p276, %p277
      %p279 = scmp.ne.s32.totalorder %s271, %s273
      %p280 = scmp.eq.s32.totalorder %s32, 1
      %p281 = por %p279, %p280
      %p282 = scmp.ne.s32.totalorder %s273, %s274
      %p283 = scmp.eq.s32.totalorder %s32, 0
      %p284 = por %p282, %p283
      %p285 = scmp.ne.s32.totalorder %s273, %s274
      %p286 = scmp.eq.s32.totalorder %s33, 1
      %p287 = por %p285, %p286
      %p289 = scmp.ne.s32.totalorder %s274, %s288
      %p290 = scmp.eq.s32.totalorder %s33, 0
      %p291 = por %p289, %p290
      %s293 = sadd.s32 %s292, 1
      %p296 = scmp.eq.s32.totalorder %s27, 1
      %p297 = scmp.ne.s32.totalorder %s292, %s294
      %p298 = scmp.eq.s32.totalorder %s27, 0
      %p299 = por %p297, %p298
      %p300 = scmp.ne.s32.totalorder %s292, %s294
      %p301 = scmp.eq.s32.totalorder %s32, 1
      %p302 = por %p300, %p301
      %p303 = scmp.ne.s32.totalorder %s294, %s295
      %p304 = scmp.eq.s32.totalorder %s32, 0
      %p305 = por %p303, %p304
      %p306 = scmp.ne.s32.totalorder %s294, %s295
      %p307 = scmp.eq.s32.totalorder %s33, 1
      %p308 = por %p306, %p307
      %p310 = scmp.ne.s32.totalorder %s295, %s309
      %p311 = scmp.eq.s32.totalorder %s33, 0
      %p312 = por %p310, %p311
      %s313 = ssub.s32 %s27, %s34
      %p314 = scmp.eq.s32.totalorder %s313, 0
      %s316 = sadd.s32 %s315, 1
      %s317 = scalar_select %p314, %s315, %s316
      %p320 = pneg %p314
      %p321 = scmp.eq.s32.totalorder %s27, 1
      %p322 = por %p320, %p321
      %p323 = scmp.ne.s32.totalorder %s315, %s318
      %p324 = scmp.eq.s32.totalorder %s27, 0
      %p325 = por %p323, %p324
      %p326 = scmp.ne.s32.totalorder %s315, %s318
      %p327 = scmp.eq.s32.totalorder %s32, 1
      %p328 = por %p326, %p327
      %p329 = scmp.ne.s32.totalorder %s318, %s319
      %p330 = scmp.eq.s32.totalorder %s32, 0
      %p331 = por %p329, %p330
      %p332 = scmp.ne.s32.totalorder %s318, %s319
      %p333 = scmp.eq.s32.totalorder %s33, 1
      %p334 = por %p332, %p333
      %p336 = scmp.ne.s32.totalorder %s319, %s335
      %p337 = scmp.eq.s32.totalorder %s33, 0
      %p338 = por %p336, %p337
      %s339 = ssub.s32 %s27, %s34
      %p340 = scmp.eq.s32.totalorder %s339, 0
      %s342 = sadd.s32 %s341, 1
      %s343 = scalar_select %p340, %s341, %s342
      %p346 = pneg %p340
      %p347 = scmp.eq.s32.totalorder %s27, 1
      %p348 = por %p346, %p347
      %p349 = scmp.ne.s32.totalorder %s341, %s344
      %p350 = scmp.eq.s32.totalorder %s27, 0
      %p351 = por %p349, %p350
      %p352 = scmp.ne.s32.totalorder %s341, %s344
      %p353 = scmp.eq.s32.totalorder %s32, 1
      %p354 = por %p352, %p353
      %p355 = scmp.ne.s32.totalorder %s344, %s345
      %p356 = scmp.eq.s32.totalorder %s32, 0
      %p357 = por %p355, %p356
      %p358 = scmp.ne.s32.totalorder %s344, %s345
      %p359 = scmp.eq.s32.totalorder %s33, 1
      %p360 = por %p358, %p359
      %p362 = scmp.ne.s32.totalorder %s345, %s361
      %p363 = scmp.eq.s32.totalorder %s33, 0
      %p364 = por %p362, %p363
      %p365 = scmp.le.s32.totalorder 1, %s27
      %p366 = scmp.lt.s32.totalorder %s27, 3
      %p367 = pnand %p365, %p366
      %p368 = pneg %p367
      // Predicated region
      $region9: #{tpu_custom_call.1} parent=5 // pred_check
        _
      $region10: #{tpu_custom_call.1} parent=5 // pred_check_branch
        %370 = sbr.rel (%p367) target = $region12
      $region11: #{tpu_custom_call.1} parent=5 // pred_region
        %s371 = ssub.s32 %s27, 1
        // Predicated region
        $region13: #{tpu_custom_call.1} parent=11 // pred_check
          %p372 = pneg %p74
        $region14: #{tpu_custom_call.1} parent=11 // pred_check_branch
          %374 = sbr.rel (%p372) target = $region16
        $region15: #{tpu_custom_call.1} parent=11 // pred_region
          _
        $region16: #{tpu_custom_call.1} parent=11 // pred_fallthru
          _
        // Predicated region
        $region17: #{tpu_custom_call.1} parent=11 // pred_check
          %p375 = pneg %p95
        $region18: #{tpu_custom_call.1} parent=11 // pred_check_branch
          %377 = sbr.rel (%p375) target = $region20
        $region19: #{tpu_custom_call.1} parent=11 // pred_region
          _
        $region20: #{tpu_custom_call.1} parent=11 // pred_fallthru
          _
        // Predicated region
        $region21: #{tpu_custom_call.1} parent=11 // pred_check
          %p378 = pneg %p116
        $region22: #{tpu_custom_call.1} parent=11 // pred_check_branch
          %380 = sbr.rel (%p378) target = $region24
        $region23: #{tpu_custom_call.1} parent=11 // pred_region
          _
        $region24: #{tpu_custom_call.1} parent=11 // pred_fallthru
          _
        // Predicated region
        $region25: #{tpu_custom_call.1} parent=11 // pred_check
          %p381 = pneg %p137
        $region26: #{tpu_custom_call.1} parent=11 // pred_check_branch
          %383 = sbr.rel (%p381) target = $region28
        $region27: #{tpu_custom_call.1} parent=11 // pred_region
          _
        $region28: #{tpu_custom_call.1} parent=11 // pred_fallthru
          _
        // Predicated region
        $region29: #{tpu_custom_call.1} parent=11 // pred_check
          %p384 = pneg %p158
        $region30: #{tpu_custom_call.1} parent=11 // pred_check_branch
          %386 = sbr.rel (%p384) target = $region32
        $region31: #{tpu_custom_call.1} parent=11 // pred_region
          _
        $region32: #{tpu_custom_call.1} parent=11 // pred_fallthru
          _
        // Predicated region
        $region33: #{tpu_custom_call.1} parent=11 // pred_check
          %p387 = pneg %p179
        $region34: #{tpu_custom_call.1} parent=11 // pred_check_branch
          %389 = sbr.rel (%p387) target = $region36
        $region35: #{tpu_custom_call.1} parent=11 // pred_region
          _
        $region36: #{tpu_custom_call.1} parent=11 // pred_fallthru
          _
        // Predicated region
        $region37: #{tpu_custom_call.1} parent=11 // pred_check
          %p390 = pneg %p200
        $region38: #{tpu_custom_call.1} parent=11 // pred_check_branch
          %392 = sbr.rel (%p390) target = $region40
        $region39: #{tpu_custom_call.1} parent=11 // pred_region
          _
        $region40: #{tpu_custom_call.1} parent=11 // pred_fallthru
          _
        // Predicated region
        $region41: #{tpu_custom_call.1} parent=11 // pred_check
          %p393 = pneg %p221
        $region42: #{tpu_custom_call.1} parent=11 // pred_check_branch
          %395 = sbr.rel (%p393) target = $region44
        $region43: #{tpu_custom_call.1} parent=11 // pred_region
          _
        $region44: #{tpu_custom_call.1} parent=11 // pred_fallthru
          _
        // Predicated region
        $region45: #{tpu_custom_call.1} parent=11 // pred_check
          %p396 = pneg %p242
        $region46: #{tpu_custom_call.1} parent=11 // pred_check_branch
          %398 = sbr.rel (%p396) target = $region48
        $region47: #{tpu_custom_call.1} parent=11 // pred_region
          _
        $region48: #{tpu_custom_call.1} parent=11 // pred_fallthru
          _
        // Predicated region
        $region49: #{tpu_custom_call.1} parent=11 // pred_check
          %p399 = pneg %p263
        $region50: #{tpu_custom_call.1} parent=11 // pred_check_branch
          %401 = sbr.rel (%p399) target = $region52
        $region51: #{tpu_custom_call.1} parent=11 // pred_region
          _
        $region52: #{tpu_custom_call.1} parent=11 // pred_fallthru
          _
        // Predicated region
        $region53: #{tpu_custom_call.1} parent=11 // pred_check
          %p402 = pneg %p284
        $region54: #{tpu_custom_call.1} parent=11 // pred_check_branch
          %404 = sbr.rel (%p402) target = $region56
        $region55: #{tpu_custom_call.1} parent=11 // pred_region
          _
        $region56: #{tpu_custom_call.1} parent=11 // pred_fallthru
          _
        // Predicated region
        $region57: #{tpu_custom_call.1} parent=11 // pred_check
          %p405 = pneg %p305
        $region58: #{tpu_custom_call.1} parent=11 // pred_check_branch
          %407 = sbr.rel (%p405) target = $region60
        $region59: #{tpu_custom_call.1} parent=11 // pred_region
          _
        $region60: #{tpu_custom_call.1} parent=11 // pred_fallthru
          _
      $region12: #{tpu_custom_call.1} parent=5 // pred_fallthru
        _
      %p408 = scmp.lt.s32.totalorder %s27, 2
      // Predicated region
      $region61: #{tpu_custom_call.1} parent=5 // pred_check
        %p409 = pneg %p408
      $region62: #{tpu_custom_call.1} parent=5 // pred_check_branch
        %411 = sbr.rel (%p409) target = $region64
      $region63: #{tpu_custom_call.1} parent=5 // pred_region
        // Predicated region
        $region65: #{tpu_custom_call.1} parent=63 // pred_check
          %p412 = pneg %p47
        $region66: #{tpu_custom_call.1} parent=63 // pred_check_branch
          %414 = sbr.rel (%p412) target = $region68
        $region67: #{tpu_custom_call.1} parent=63 // pred_region
          %s415 = smul.u32 4, %s27
          %p416 = scmp.lt.s32.totalorder %s415, 7
          %s417 = scalar_select %p416, %s415, 7
          %s418 = smul.addr %s417, 8
          %s419 = scalar_lea.vmem %s0, %s418
          %s420 = smul.u32 4, %s27
        $region68: #{tpu_custom_call.1} parent=63 // pred_fallthru
          _
      $region64: #{tpu_custom_call.1} parent=5 // pred_fallthru
        _
      %p421 = scmp.le.s32.totalorder 1, %s27
      %p422 = scmp.lt.s32.totalorder %s27, 3
      %p423 = pnand %p421, %p422
      %p424 = pneg %p423
      // Predicated region
      $region69: #{tpu_custom_call.1} parent=5 // pred_check
        _
      $region70: #{tpu_custom_call.1} parent=5 // pred_check_branch
        %426 = sbr.rel (%p423) target = $region72
      $region71: #{tpu_custom_call.1} parent=5 // pred_region
        %s427 = ssub.s32 %s27, 1
        %s428 = smul.u32 4, %s32
        %p429 = scmp.lt.s32.totalorder %s428, 7
        %s430 = scalar_select %p429, %s428, 7
        %s431 = smul.addr %s430, 8
        %s432 = scalar_lea.vmem %s0, %s431
        %p433 = pneg %p53
        %p434 = pneg %p50
        %p435 = pneg %p74
        %p436 = pneg %p71
        %p437 = pneg %p95
        %p438 = pneg %p92
        %p439 = pneg %p116
        %p440 = pneg %p113
        %p441 = pneg %p137
        %p442 = pneg %p134
        %p443 = pneg %p158
        %p444 = pneg %p155
        %p445 = pneg %p179
        %p446 = pneg %p176
        %p447 = pneg %p200
        %p448 = pneg %p197
        %p449 = pneg %p221
        %p450 = pneg %p218
        %p451 = pneg %p242
        %p452 = pneg %p239
        %p453 = pneg %p263
        %p454 = pneg %p260
        %p455 = pneg %p284
        %p456 = pneg %p281
        %p457 = pneg %p305
        %p458 = pneg %p302
        %p459 = pneg %p331
        %p460 = pneg %p328
        %s461 = sand.u32 %s318, 1
        %s462 = scalar_lea.sflag [#allocation3], %s461
        %s463 = sand.u32 %s318, 1
        %s464 = smul.addr %s463, 32
        %s465 = scalar_lea.vmem [#allocation2], %s464
        %p466 = pneg %p357
        %p467 = pneg %p354
        %s468 = sand.u32 %s344, 1
        %s469 = scalar_lea.sflag [#allocation5], %s468
        %s470 = sand.u32 %s344, 1
        %s471 = smul.addr %s470, 4
        %s472 = scalar_lea.vmem [#allocation4], %s471
        %s473 = smul.u32 4, %s32
        %p474 = scmp.lt.s32.totalorder %s473, 7
        %s475 = scalar_select %p474, %s473, 7
        %s476 = smul.addr %s475, 8
        %s477 = scalar_lea.vmem %s0, %s476
        %s478 = smul.u32 4, %s32
        %s479 = smul.u32 4, %s32
        %s480 = smul.u32 4, %s32
        %v481 = vld [vmem:[%s477] sm:$0xff]
        %v482 = vld [vmem:[%s477 + $0x8] sm:$0xff]
        %v483 = vld [vmem:[%s477 + $0x10] sm:$0xff]
        %v484 = vld [vmem:[%s477 + $0x18] sm:$0xff]
        %v485 = vld [vmem:[%s1] sm:$0xff]
        %v486 = vld [vmem:[%s1 + $0x8] sm:$0xff]
        %v487 = vld [vmem:[%s1 + $0x10] sm:$0xff]
        %v488 = vld [vmem:[%s1 + $0x18] sm:$0xff]
        %v489 = vld [vmem:[%s1 + $0x20] sm:$0xff]
        %v490 = vld [vmem:[%s1 + $0x28] sm:$0xff]
        %v491 = vld [vmem:[%s1 + $0x30] sm:$0xff]
        %v492 = vld [vmem:[%s1 + $0x38] sm:$0xff]
        %v493 = vld [vmem:[%s2] sm:$0xff]
        %v494 = vld [vmem:[%s2 + $0x8] sm:$0xff]
        %v495 = vld [vmem:[%s2 + $0x10] sm:$0xff]
        %v496 = vld [vmem:[%s2 + $0x18] sm:$0xff]
        %v497 = vld [vmem:[%s2 + $0x20] sm:$0xff]
        %v498 = vld [vmem:[%s2 + $0x28] sm:$0xff]
        %v499 = vld [vmem:[%s2 + $0x30] sm:$0xff]
        %v500 = vld [vmem:[%s2 + $0x38] sm:$0xff]
        %502 = vset.pattern.permute.xlu0 0
        %503 = vperm.xlu0 %502, %v493
        %v504 = vpop.permute.xlu0 %503
        %507 = vset.pattern.permute.xlu0 0
        %508 = vperm.xlu0 %507, %v494
        %v509 = vpop.permute.xlu0 %508
        %512 = vset.pattern.permute.xlu0 0
        %513 = vperm.xlu0 %512, %v495
        %v514 = vpop.permute.xlu0 %513
        %517 = vset.pattern.permute.xlu0 0
        %518 = vperm.xlu0 %517, %v496
        %v519 = vpop.permute.xlu0 %518
        %522 = vset.pattern.permute.xlu0 0
        %523 = vperm.xlu0 %522, %v497
        %v524 = vpop.permute.xlu0 %523
        %527 = vset.pattern.permute.xlu0 0
        %528 = vperm.xlu0 %527, %v498
        %v529 = vpop.permute.xlu0 %528
        %532 = vset.pattern.permute.xlu0 0
        %533 = vperm.xlu0 %532, %v499
        %v534 = vpop.permute.xlu0 %533
        %537 = vset.pattern.permute.xlu0 0
        %538 = vperm.xlu0 %537, %v500
        %v539 = vpop.permute.xlu0 %538
        %vm541 = vcmask 31744
        %v543 = vsel %vm541, %v485, 0
        %v546 = vsel %vm541, %v486, 0
        %v549 = vsel %vm541, %v487, 0
        %v552 = vsel %vm541, %v488, 0
        %v555 = vsel %vm541, %v489, 0
        %v558 = vsel %vm541, %v490, 0
        %v561 = vsel %vm541, %v491, 0
        %v564 = vsel %vm541, %v492, 0
        %vm566 = vcmask 1043456
        %v568 = vsel %vm566, %v481, 0
        %v571 = vsel %vm566, %v482, 0
        %v574 = vsel %vm566, %v483, 0
        %v577 = vsel %vm566, %v484, 0
        %579 = vmatpush.msra.mxu0 0.0
        %580 = vmatpush.msra.mxu0 0.0
        %581 = vmatpush.msra.mxu0 0.0
        %582 = vmatpush.msra.mxu0 0.0
        %583 = vmatpush.msra.mxu0 0.0
        %584 = vmatpush.msra.mxu0 0.0
        %585 = vmatpush.msra.mxu0 0.0
        %586 = vmatpush.msra.mxu0 0.0
        %587 = vmatpush.msra.mxu0 0.0
        %588 = vmatpush.msra.mxu0 0.0
        %589 = vmatpush.msra.mxu0 0.0
        %590 = vmatpush.msra.mxu0 0.0
        %591 = vmatpush.msra.mxu0 0.0
        %592 = vmatpush.msra.mxu0 0.0
        %593 = vmatpush.msra.mxu0 0.0
        %594 = vmatpush.msra.mxu0 %v568
        %595 = vmatmul.f32.gmra.mxu0 %v543
        %v596 = vpop.f32.mrf.mxu0
        %v597 = vadd.f32 %v504, %v596
        %598 = vmatmul.f32.gmra.mxu0 %v546
        %v599 = vpop.f32.mrf.mxu0
        %v600 = vadd.f32 %v509, %v599
        %601 = vmatmul.f32.gmra.mxu0 %v549
        %v602 = vpop.f32.mrf.mxu0
        %v603 = vadd.f32 %v514, %v602
        %604 = vmatmul.f32.gmra.mxu0 %v552
        %v605 = vpop.f32.mrf.mxu0
        %v606 = vadd.f32 %v519, %v605
        %607 = vmatmul.f32.gmra.mxu0 %v555
        %v608 = vpop.f32.mrf.mxu0
        %v609 = vadd.f32 %v524, %v608
        %610 = vmatmul.f32.gmra.mxu0 %v558
        %v611 = vpop.f32.mrf.mxu0
        %v612 = vadd.f32 %v529, %v611
        %613 = vmatmul.f32.gmra.mxu0 %v561
        %v614 = vpop.f32.mrf.mxu0
        %v615 = vadd.f32 %v534, %v614
        %616 = vmatmul.f32.gmra.mxu0 %v564
        %v617 = vpop.f32.mrf.mxu0
        %v618 = vadd.f32 %v539, %v617
        %619 = vdwg.mxu0
        %620 = vmatpush.msra.mxu0 0.0
        %621 = vmatpush.msra.mxu0 0.0
        %622 = vmatpush.msra.mxu0 0.0
        %623 = vmatpush.msra.mxu0 0.0
        %624 = vmatpush.msra.mxu0 0.0
        %625 = vmatpush.msra.mxu0 0.0
        %626 = vmatpush.msra.mxu0 0.0
        %627 = vmatpush.msra.mxu0 0.0
        %628 = vmatpush.msra.mxu0 0.0
        %629 = vmatpush.msra.mxu0 0.0
        %630 = vmatpush.msra.mxu0 0.0
        %631 = vmatpush.msra.mxu0 0.0
        %632 = vmatpush.msra.mxu0 0.0
        %633 = vmatpush.msra.mxu0 0.0
        %634 = vmatpush.msra.mxu0 0.0
        %635 = vmatpush.msra.mxu0 %v571
        %636 = vmatmul.f32.gmra.mxu0 %v543
        %v637 = vpop.f32.mrf.mxu0
        %v638 = vadd.f32 %v504, %v637
        %639 = vmatmul.f32.gmra.mxu0 %v546
        %v640 = vpop.f32.mrf.mxu0
        %v641 = vadd.f32 %v509, %v640
        %642 = vmatmul.f32.gmra.mxu0 %v549
        %v643 = vpop.f32.mrf.mxu0
        %v644 = vadd.f32 %v514, %v643
        %645 = vmatmul.f32.gmra.mxu0 %v552
        %v646 = vpop.f32.mrf.mxu0
        %v647 = vadd.f32 %v519, %v646
        %648 = vmatmul.f32.gmra.mxu0 %v555
        %v649 = vpop.f32.mrf.mxu0
        %v650 = vadd.f32 %v524, %v649
        %651 = vmatmul.f32.gmra.mxu0 %v558
        %v652 = vpop.f32.mrf.mxu0
        %v653 = vadd.f32 %v529, %v652
        %654 = vmatmul.f32.gmra.mxu0 %v561
        %v655 = vpop.f32.mrf.mxu0
        %v656 = vadd.f32 %v534, %v655
        %657 = vmatmul.f32.gmra.mxu0 %v564
        %v658 = vpop.f32.mrf.mxu0
        %v659 = vadd.f32 %v539, %v658
        %660 = vdwg.mxu0
        %661 = vmatpush.msra.mxu0 0.0
        %662 = vmatpush.msra.mxu0 0.0
        %663 = vmatpush.msra.mxu0 0.0
        %664 = vmatpush.msra.mxu0 0.0
        %665 = vmatpush.msra.mxu0 0.0
        %666 = vmatpush.msra.mxu0 0.0
        %667 = vmatpush.msra.mxu0 0.0
        %668 = vmatpush.msra.mxu0 0.0
        %669 = vmatpush.msra.mxu0 0.0
        %670 = vmatpush.msra.mxu0 0.0
        %671 = vmatpush.msra.mxu0 0.0
        %672 = vmatpush.msra.mxu0 0.0
        %673 = vmatpush.msra.mxu0 0.0
        %674 = vmatpush.msra.mxu0 0.0
        %675 = vmatpush.msra.mxu0 0.0
        %676 = vmatpush.msra.mxu0 %v574
        %677 = vmatmul.f32.gmra.mxu0 %v543
        %v678 = vpop.f32.mrf.mxu0
        %v679 = vadd.f32 %v504, %v678
        %680 = vmatmul.f32.gmra.mxu0 %v546
        %v681 = vpop.f32.mrf.mxu0
        %v682 = vadd.f32 %v509, %v681
        %683 = vmatmul.f32.gmra.mxu0 %v549
        %v684 = vpop.f32.mrf.mxu0
        %v685 = vadd.f32 %v514, %v684
        %686 = vmatmul.f32.gmra.mxu0 %v552
        %v687 = vpop.f32.mrf.mxu0
        %v688 = vadd.f32 %v519, %v687
        %689 = vmatmul.f32.gmra.mxu0 %v555
        %v690 = vpop.f32.mrf.mxu0
        %v691 = vadd.f32 %v524, %v690
        %692 = vmatmul.f32.gmra.mxu0 %v558
        %v693 = vpop.f32.mrf.mxu0
        %v694 = vadd.f32 %v529, %v693
        %695 = vmatmul.f32.gmra.mxu0 %v561
        %v696 = vpop.f32.mrf.mxu0
        %v697 = vadd.f32 %v534, %v696
        %698 = vmatmul.f32.gmra.mxu0 %v564
        %v699 = vpop.f32.mrf.mxu0
        %v700 = vadd.f32 %v539, %v699
        %701 = vdwg.mxu0
        %702 = vmatpush.msra.mxu0 0.0
        %703 = vmatpush.msra.mxu0 0.0
        %704 = vmatpush.msra.mxu0 0.0
        %705 = vmatpush.msra.mxu0 0.0
        %706 = vmatpush.msra.mxu0 0.0
        %707 = vmatpush.msra.mxu0 0.0
        %708 = vmatpush.msra.mxu0 0.0
        %709 = vmatpush.msra.mxu0 0.0
        %710 = vmatpush.msra.mxu0 0.0
        %711 = vmatpush.msra.mxu0 0.0
        %712 = vmatpush.msra.mxu0 0.0
        %713 = vmatpush.msra.mxu0 0.0
        %714 = vmatpush.msra.mxu0 0.0
        %715 = vmatpush.msra.mxu0 0.0
        %716 = vmatpush.msra.mxu0 0.0
        %717 = vmatpush.msra.mxu0 %v577
        %718 = vmatmul.f32.gmra.mxu0 %v543
        %v719 = vpop.f32.mrf.mxu0
        %v720 = vadd.f32 %v504, %v719
        %721 = vmatmul.f32.gmra.mxu0 %v546
        %v722 = vpop.f32.mrf.mxu0
        %v723 = vadd.f32 %v509, %v722
        %724 = vmatmul.f32.gmra.mxu0 %v549
        %v725 = vpop.f32.mrf.mxu0
        %v726 = vadd.f32 %v514, %v725
        %727 = vmatmul.f32.gmra.mxu0 %v552
        %v728 = vpop.f32.mrf.mxu0
        %v729 = vadd.f32 %v519, %v728
        %730 = vmatmul.f32.gmra.mxu0 %v555
        %v731 = vpop.f32.mrf.mxu0
        %v732 = vadd.f32 %v524, %v731
        %733 = vmatmul.f32.gmra.mxu0 %v558
        %v734 = vpop.f32.mrf.mxu0
        %v735 = vadd.f32 %v529, %v734
        %736 = vmatmul.f32.gmra.mxu0 %v561
        %v737 = vpop.f32.mrf.mxu0
        %v738 = vadd.f32 %v534, %v737
        %739 = vmatmul.f32.gmra.mxu0 %v564
        %v740 = vpop.f32.mrf.mxu0
        %v741 = vadd.f32 %v539, %v740
        %742 = vdwg.mxu0
        %v743 = vtanh.pop %v597
        %v744 = vtanh.pop %v638
        %v745 = vtanh.pop %v679
        %v746 = vtanh.pop %v720
        %v747 = vtanh.pop %v600
        %v748 = vtanh.pop %v641
        %v749 = vtanh.pop %v682
        %v750 = vtanh.pop %v723
        %v751 = vtanh.pop %v603
        %v752 = vtanh.pop %v644
        %v753 = vtanh.pop %v685
        %v754 = vtanh.pop %v726
        %v755 = vtanh.pop %v606
        %v756 = vtanh.pop %v647
        %v757 = vtanh.pop %v688
        %v758 = vtanh.pop %v729
        %v759 = vtanh.pop %v609
        %v760 = vtanh.pop %v650
        %v761 = vtanh.pop %v691
        %v762 = vtanh.pop %v732
        %v763 = vtanh.pop %v612
        %v764 = vtanh.pop %v653
        %v765 = vtanh.pop %v694
        %v766 = vtanh.pop %v735
        %v767 = vtanh.pop %v615
        %v768 = vtanh.pop %v656
        %v769 = vtanh.pop %v697
        %v770 = vtanh.pop %v738
        %v771 = vtanh.pop %v618
        %v772 = vtanh.pop %v659
        %v773 = vtanh.pop %v700
        %v774 = vtanh.pop %v741
        %v775 = vld [vmem:[%s3] sm:$0xff]
        %v776 = vld [vmem:[%s3 + $0x8] sm:$0xff]
        %v777 = vld [vmem:[%s3 + $0x10] sm:$0xff]
        %v778 = vld [vmem:[%s3 + $0x18] sm:$0xff]
        %v779 = vld [vmem:[%s3 + $0x20] sm:$0xff]
        %v780 = vld [vmem:[%s3 + $0x28] sm:$0xff]
        %v781 = vld [vmem:[%s3 + $0x30] sm:$0xff]
        %v782 = vld [vmem:[%s3 + $0x38] sm:$0xff]
        %v783 = vld [vmem:[%s4] sm:$0xff]
        %v784 = vld [vmem:[%s4 + $0x8] sm:$0xff]
        %v785 = vld [vmem:[%s4 + $0x10] sm:$0xff]
        %v786 = vld [vmem:[%s4 + $0x18] sm:$0xff]
        %v787 = vld [vmem:[%s4 + $0x20] sm:$0xff]
        %v788 = vld [vmem:[%s4 + $0x28] sm:$0xff]
        %v789 = vld [vmem:[%s4 + $0x30] sm:$0xff]
        %v790 = vld [vmem:[%s4 + $0x38] sm:$0xff]
        %792 = vset.pattern.permute.xlu0 0
        %793 = vperm.xlu0 %792, %v783
        %v794 = vpop.permute.xlu0 %793
        %797 = vset.pattern.permute.xlu0 0
        %798 = vperm.xlu0 %797, %v784
        %v799 = vpop.permute.xlu0 %798
        %802 = vset.pattern.permute.xlu0 0
        %803 = vperm.xlu0 %802, %v785
        %v804 = vpop.permute.xlu0 %803
        %807 = vset.pattern.permute.xlu0 0
        %808 = vperm.xlu0 %807, %v786
        %v809 = vpop.permute.xlu0 %808
        %812 = vset.pattern.permute.xlu0 0
        %813 = vperm.xlu0 %812, %v787
        %v814 = vpop.permute.xlu0 %813
        %817 = vset.pattern.permute.xlu0 0
        %818 = vperm.xlu0 %817, %v788
        %v819 = vpop.permute.xlu0 %818
        %822 = vset.pattern.permute.xlu0 0
        %823 = vperm.xlu0 %822, %v789
        %v824 = vpop.permute.xlu0 %823
        %827 = vset.pattern.permute.xlu0 0
        %828 = vperm.xlu0 %827, %v790
        %v829 = vpop.permute.xlu0 %828
        %vm831 = vcmask 523264
        %v833 = vsel %vm831, %v775, 0
        %v836 = vsel %vm831, %v776, 0
        %v839 = vsel %vm831, %v777, 0
        %v842 = vsel %vm831, %v778, 0
        %v845 = vsel %vm831, %v779, 0
        %v848 = vsel %vm831, %v780, 0
        %v851 = vsel %vm831, %v781, 0
        %v854 = vsel %vm831, %v782, 0
        %856 = vmatpush.msra.mxu0 0.0
        %857 = vmatpush.msra.mxu0 0.0
        %858 = vmatpush.msra.mxu0 0.0
        %859 = vmatpush.msra.mxu0 0.0
        %860 = vmatpush.msra.mxu0 0.0
        %861 = vmatpush.msra.mxu0 0.0
        %862 = vmatpush.msra.mxu0 0.0
        %863 = vmatpush.msra.mxu0 0.0
        %864 = vmatpush.msra.mxu0 %v771
        %865 = vmatpush.msra.mxu0 %v767
        %866 = vmatpush.msra.mxu0 %v763
        %867 = vmatpush.msra.mxu0 %v759
        %868 = vmatpush.msra.mxu0 %v755
        %869 = vmatpush.msra.mxu0 %v751
        %870 = vmatpush.msra.mxu0 %v747
        %871 = vmatpush.msra.mxu0 %v743
        %872 = vmatmul.f32.gmra.mxu0 %v833
        %v873 = vpop.f32.mrf.mxu0
        %v874 = vadd.f32 %v794, %v873
        %875 = vmatmul.f32.gmra.mxu0 %v836
        %v876 = vpop.f32.mrf.mxu0
        %v877 = vadd.f32 %v799, %v876
        %878 = vmatmul.f32.gmra.mxu0 %v839
        %v879 = vpop.f32.mrf.mxu0
        %v880 = vadd.f32 %v804, %v879
        %881 = vmatmul.f32.gmra.mxu0 %v842
        %v882 = vpop.f32.mrf.mxu0
        %v883 = vadd.f32 %v809, %v882
        %884 = vmatmul.f32.gmra.mxu0 %v845
        %v885 = vpop.f32.mrf.mxu0
        %v886 = vadd.f32 %v814, %v885
        %887 = vmatmul.f32.gmra.mxu0 %v848
        %v888 = vpop.f32.mrf.mxu0
        %v889 = vadd.f32 %v819, %v888
        %890 = vmatmul.f32.gmra.mxu0 %v851
        %v891 = vpop.f32.mrf.mxu0
        %v892 = vadd.f32 %v824, %v891
        %893 = vmatmul.f32.gmra.mxu0 %v854
        %v894 = vpop.f32.mrf.mxu0
        %v895 = vadd.f32 %v829, %v894
        %896 = vdwg.mxu0
        %897 = vmatpush.msra.mxu0 0.0
        %898 = vmatpush.msra.mxu0 0.0
        %899 = vmatpush.msra.mxu0 0.0
        %900 = vmatpush.msra.mxu0 0.0
        %901 = vmatpush.msra.mxu0 0.0
        %902 = vmatpush.msra.mxu0 0.0
        %903 = vmatpush.msra.mxu0 0.0
        %904 = vmatpush.msra.mxu0 0.0
        %905 = vmatpush.msra.mxu0 %v772
        %906 = vmatpush.msra.mxu0 %v768
        %907 = vmatpush.msra.mxu0 %v764
        %908 = vmatpush.msra.mxu0 %v760
        %909 = vmatpush.msra.mxu0 %v756
        %910 = vmatpush.msra.mxu0 %v752
        %911 = vmatpush.msra.mxu0 %v748
        %912 = vmatpush.msra.mxu0 %v744
        %913 = vmatmul.f32.gmra.mxu0 %v833
        %v914 = vpop.f32.mrf.mxu0
        %v915 = vadd.f32 %v794, %v914
        %916 = vmatmul.f32.gmra.mxu0 %v836
        %v917 = vpop.f32.mrf.mxu0
        %v918 = vadd.f32 %v799, %v917
        %919 = vmatmul.f32.gmra.mxu0 %v839
        %v920 = vpop.f32.mrf.mxu0
        %v921 = vadd.f32 %v804, %v920
        %922 = vmatmul.f32.gmra.mxu0 %v842
        %v923 = vpop.f32.mrf.mxu0
        %v924 = vadd.f32 %v809, %v923
        %925 = vmatmul.f32.gmra.mxu0 %v845
        %v926 = vpop.f32.mrf.mxu0
        %v927 = vadd.f32 %v814, %v926
        %928 = vmatmul.f32.gmra.mxu0 %v848
        %v929 = vpop.f32.mrf.mxu0
        %v930 = vadd.f32 %v819, %v929
        %931 = vmatmul.f32.gmra.mxu0 %v851
        %v932 = vpop.f32.mrf.mxu0
        %v933 = vadd.f32 %v824, %v932
        %934 = vmatmul.f32.gmra.mxu0 %v854
        %v935 = vpop.f32.mrf.mxu0
        %v936 = vadd.f32 %v829, %v935
        %937 = vdwg.mxu0
        %938 = vmatpush.msra.mxu0 0.0
        %939 = vmatpush.msra.mxu0 0.0
        %940 = vmatpush.msra.mxu0 0.0
        %941 = vmatpush.msra.mxu0 0.0
        %942 = vmatpush.msra.mxu0 0.0
        %943 = vmatpush.msra.mxu0 0.0
        %944 = vmatpush.msra.mxu0 0.0
        %945 = vmatpush.msra.mxu0 0.0
        %946 = vmatpush.msra.mxu0 %v773
        %947 = vmatpush.msra.mxu0 %v769
        %948 = vmatpush.msra.mxu0 %v765
        %949 = vmatpush.msra.mxu0 %v761
        %950 = vmatpush.msra.mxu0 %v757
        %951 = vmatpush.msra.mxu0 %v753
        %952 = vmatpush.msra.mxu0 %v749
        %953 = vmatpush.msra.mxu0 %v745
        %954 = vmatmul.f32.gmra.mxu0 %v833
        %v955 = vpop.f32.mrf.mxu0
        %v956 = vadd.f32 %v794, %v955
        %957 = vmatmul.f32.gmra.mxu0 %v836
        %v958 = vpop.f32.mrf.mxu0
        %v959 = vadd.f32 %v799, %v958
        %960 = vmatmul.f32.gmra.mxu0 %v839
        %v961 = vpop.f32.mrf.mxu0
        %v962 = vadd.f32 %v804, %v961
        %963 = vmatmul.f32.gmra.mxu0 %v842
        %v964 = vpop.f32.mrf.mxu0
        %v965 = vadd.f32 %v809, %v964
        %966 = vmatmul.f32.gmra.mxu0 %v845
        %v967 = vpop.f32.mrf.mxu0
        %v968 = vadd.f32 %v814, %v967
        %969 = vmatmul.f32.gmra.mxu0 %v848
        %v970 = vpop.f32.mrf.mxu0
        %v971 = vadd.f32 %v819, %v970
        %972 = vmatmul.f32.gmra.mxu0 %v851
        %v973 = vpop.f32.mrf.mxu0
        %v974 = vadd.f32 %v824, %v973
        %975 = vmatmul.f32.gmra.mxu0 %v854
        %v976 = vpop.f32.mrf.mxu0
        %v977 = vadd.f32 %v829, %v976
        %978 = vdwg.mxu0
        %979 = vmatpush.msra.mxu0 0.0
        %980 = vmatpush.msra.mxu0 0.0
        %981 = vmatpush.msra.mxu0 0.0
        %982 = vmatpush.msra.mxu0 0.0
        %983 = vmatpush.msra.mxu0 0.0
        %984 = vmatpush.msra.mxu0 0.0
        %985 = vmatpush.msra.mxu0 0.0
        %986 = vmatpush.msra.mxu0 0.0
        %987 = vmatpush.msra.mxu0 %v774
        %988 = vmatpush.msra.mxu0 %v770
        %989 = vmatpush.msra.mxu0 %v766
        %990 = vmatpush.msra.mxu0 %v762
        %991 = vmatpush.msra.mxu0 %v758
        %992 = vmatpush.msra.mxu0 %v754
        %993 = vmatpush.msra.mxu0 %v750
        %994 = vmatpush.msra.mxu0 %v746
        %995 = vmatmul.f32.gmra.mxu0 %v833
        %v996 = vpop.f32.mrf.mxu0
        %v997 = vadd.f32 %v794, %v996
        %998 = vmatmul.f32.gmra.mxu0 %v836
        %v999 = vpop.f32.mrf.mxu0
        %v1000 = vadd.f32 %v799, %v999
        %1001 = vmatmul.f32.gmra.mxu0 %v839
        %v1002 = vpop.f32.mrf.mxu0
        %v1003 = vadd.f32 %v804, %v1002
        %1004 = vmatmul.f32.gmra.mxu0 %v842
        %v1005 = vpop.f32.mrf.mxu0
        %v1006 = vadd.f32 %v809, %v1005
        %1007 = vmatmul.f32.gmra.mxu0 %v845
        %v1008 = vpop.f32.mrf.mxu0
        %v1009 = vadd.f32 %v814, %v1008
        %1010 = vmatmul.f32.gmra.mxu0 %v848
        %v1011 = vpop.f32.mrf.mxu0
        %v1012 = vadd.f32 %v819, %v1011
        %1013 = vmatmul.f32.gmra.mxu0 %v851
        %v1014 = vpop.f32.mrf.mxu0
        %v1015 = vadd.f32 %v824, %v1014
        %1016 = vmatmul.f32.gmra.mxu0 %v854
        %v1017 = vpop.f32.mrf.mxu0
        %v1018 = vadd.f32 %v829, %v1017
        %1019 = vdwg.mxu0
        %v1020 = vtanh.pop %v874
        %v1021 = vtanh.pop %v915
        %v1022 = vtanh.pop %v956
        %v1023 = vtanh.pop %v997
        %v1024 = vtanh.pop %v877
        %v1025 = vtanh.pop %v918
        %v1026 = vtanh.pop %v959
        %v1027 = vtanh.pop %v1000
        %v1028 = vtanh.pop %v880
        %v1029 = vtanh.pop %v921
        %v1030 = vtanh.pop %v962
        %v1031 = vtanh.pop %v1003
        %v1032 = vtanh.pop %v883
        %v1033 = vtanh.pop %v924
        %v1034 = vtanh.pop %v965
        %v1035 = vtanh.pop %v1006
        %v1036 = vtanh.pop %v886
        %v1037 = vtanh.pop %v927
        %v1038 = vtanh.pop %v968
        %v1039 = vtanh.pop %v1009
        %v1040 = vtanh.pop %v889
        %v1041 = vtanh.pop %v930
        %v1042 = vtanh.pop %v971
        %v1043 = vtanh.pop %v1012
        %v1044 = vtanh.pop %v892
        %v1045 = vtanh.pop %v933
        %v1046 = vtanh.pop %v974
        %v1047 = vtanh.pop %v1015
        %v1048 = vtanh.pop %v895
        %v1049 = vtanh.pop %v936
        %v1050 = vtanh.pop %v977
        %v1051 = vtanh.pop %v1018
        %v1052 = vld [vmem:[%s5] sm:$0xff]
        %v1053 = vld [vmem:[%s6] sm:$0xff]
        %1055 = vset.pattern.permute.xlu0 0
        %1056 = vperm.xlu0 %1055, %v1053
        %v1057 = vpop.permute.xlu0 %1056
        %v1060 = vsel %vm831, %v1052, 0
        %1062 = vmatpush.msra.mxu0 0.0
        %1063 = vmatpush.msra.mxu0 0.0
        %1064 = vmatpush.msra.mxu0 0.0
        %1065 = vmatpush.msra.mxu0 0.0
        %1066 = vmatpush.msra.mxu0 0.0
        %1067 = vmatpush.msra.mxu0 0.0
        %1068 = vmatpush.msra.mxu0 0.0
        %1069 = vmatpush.msra.mxu0 0.0
        %1070 = vmatpush.msra.mxu0 %v1048
        %1071 = vmatpush.msra.mxu0 %v1044
        %1072 = vmatpush.msra.mxu0 %v1040
        %1073 = vmatpush.msra.mxu0 %v1036
        %1074 = vmatpush.msra.mxu0 %v1032
        %1075 = vmatpush.msra.mxu0 %v1028
        %1076 = vmatpush.msra.mxu0 %v1024
        %1077 = vmatpush.msra.mxu0 %v1020
        %1078 = vmatmul.f32.gmra.mxu0 %v1060
        %v1079 = vpop.f32.mrf.mxu0
        %v1080 = vadd.f32 %v1057, %v1079
        %1081 = vdwg.mxu0
        %1082 = vmatpush.msra.mxu0 0.0
        %1083 = vmatpush.msra.mxu0 0.0
        %1084 = vmatpush.msra.mxu0 0.0
        %1085 = vmatpush.msra.mxu0 0.0
        %1086 = vmatpush.msra.mxu0 0.0
        %1087 = vmatpush.msra.mxu0 0.0
        %1088 = vmatpush.msra.mxu0 0.0
        %1089 = vmatpush.msra.mxu0 0.0
        %1090 = vmatpush.msra.mxu0 %v1049
        %1091 = vmatpush.msra.mxu0 %v1045
        %1092 = vmatpush.msra.mxu0 %v1041
        %1093 = vmatpush.msra.mxu0 %v1037
        %1094 = vmatpush.msra.mxu0 %v1033
        %1095 = vmatpush.msra.mxu0 %v1029
        %1096 = vmatpush.msra.mxu0 %v1025
        %1097 = vmatpush.msra.mxu0 %v1021
        %1098 = vmatmul.f32.gmra.mxu0 %v1060
        %v1099 = vpop.f32.mrf.mxu0
        %v1100 = vadd.f32 %v1057, %v1099
        %1101 = vdwg.mxu0
        %1102 = vmatpush.msra.mxu0 0.0
        %1103 = vmatpush.msra.mxu0 0.0
        %1104 = vmatpush.msra.mxu0 0.0
        %1105 = vmatpush.msra.mxu0 0.0
        %1106 = vmatpush.msra.mxu0 0.0
        %1107 = vmatpush.msra.mxu0 0.0
        %1108 = vmatpush.msra.mxu0 0.0
        %1109 = vmatpush.msra.mxu0 0.0
        %1110 = vmatpush.msra.mxu0 %v1050
        %1111 = vmatpush.msra.mxu0 %v1046
        %1112 = vmatpush.msra.mxu0 %v1042
        %1113 = vmatpush.msra.mxu0 %v1038
        %1114 = vmatpush.msra.mxu0 %v1034
        %1115 = vmatpush.msra.mxu0 %v1030
        %1116 = vmatpush.msra.mxu0 %v1026
        %1117 = vmatpush.msra.mxu0 %v1022
        %1118 = vmatmul.f32.gmra.mxu0 %v1060
        %v1119 = vpop.f32.mrf.mxu0
        %v1120 = vadd.f32 %v1057, %v1119
        %1121 = vdwg.mxu0
        %1122 = vmatpush.msra.mxu0 0.0
        %1123 = vmatpush.msra.mxu0 0.0
        %1124 = vmatpush.msra.mxu0 0.0
        %1125 = vmatpush.msra.mxu0 0.0
        %1126 = vmatpush.msra.mxu0 0.0
        %1127 = vmatpush.msra.mxu0 0.0
        %1128 = vmatpush.msra.mxu0 0.0
        %1129 = vmatpush.msra.mxu0 0.0
        %1130 = vmatpush.msra.mxu0 %v1051
        %1131 = vmatpush.msra.mxu0 %v1047
        %1132 = vmatpush.msra.mxu0 %v1043
        %1133 = vmatpush.msra.mxu0 %v1039
        %1134 = vmatpush.msra.mxu0 %v1035
        %1135 = vmatpush.msra.mxu0 %v1031
        %1136 = vmatpush.msra.mxu0 %v1027
        %1137 = vmatpush.msra.mxu0 %v1023
        %1138 = vmatmul.f32.gmra.mxu0 %v1060
        %v1139 = vpop.f32.mrf.mxu0
        %v1140 = vadd.f32 %v1057, %v1139
        %1141 = vdwg.mxu0
        %v1142 = vmul.f32 %v1080, 1.442695
        %v1143 = vpow.pop %v1142
        %v1144 = vmul.f32 %v1100, 1.442695
        %v1145 = vpow.pop %v1144
        %v1146 = vmul.f32 %v1120, 1.442695
        %v1147 = vpow.pop %v1146
        %v1148 = vmul.f32 %v1140, 1.442695
        %v1149 = vpow.pop %v1148
        %v1150 = vmul.f32 %v481, %v1143
        %v1151 = vmul.f32 %v482, %v1145
        %v1152 = vmul.f32 %v483, %v1147
        %v1153 = vmul.f32 %v484, %v1149
        %v1158 = vrot.slane %v1150, 4
        %v1159 = vrot.slane %v1151, 4
        %v1160 = vrot.slane %v1152, 4
        %v1161 = vrot.slane %v1153, 4
        %v1166 = vadd.f32 %v1080, %v1158
        %v1167 = vadd.f32 %v1100, %v1159
        %v1168 = vadd.f32 %v1120, %v1160
        %v1169 = vadd.f32 %v1140, %v1161
        %v1170 = vld [vmem:[%s7] sm:$0xff]
        %v1171 = vld [vmem:[%s7 + $0x8] sm:$0xff]
        %v1172 = vld [vmem:[%s7 + $0x10] sm:$0xff]
        %v1173 = vld [vmem:[%s7 + $0x18] sm:$0xff]
        %v1174 = vld [vmem:[%s7 + $0x20] sm:$0xff]
        %v1175 = vld [vmem:[%s7 + $0x28] sm:$0xff]
        %v1176 = vld [vmem:[%s7 + $0x30] sm:$0xff]
        %v1177 = vld [vmem:[%s7 + $0x38] sm:$0xff]
        %v1178 = vld [vmem:[%s8] sm:$0xff]
        %v1179 = vld [vmem:[%s8 + $0x8] sm:$0xff]
        %v1180 = vld [vmem:[%s8 + $0x10] sm:$0xff]
        %v1181 = vld [vmem:[%s8 + $0x18] sm:$0xff]
        %v1182 = vld [vmem:[%s8 + $0x20] sm:$0xff]
        %v1183 = vld [vmem:[%s8 + $0x28] sm:$0xff]
        %v1184 = vld [vmem:[%s8 + $0x30] sm:$0xff]
        %v1185 = vld [vmem:[%s8 + $0x38] sm:$0xff]
        %1187 = vset.pattern.permute.xlu0 0
        %1188 = vperm.xlu0 %1187, %v1178
        %v1189 = vpop.permute.xlu0 %1188
        %1192 = vset.pattern.permute.xlu0 0
        %1193 = vperm.xlu0 %1192, %v1179
        %v1194 = vpop.permute.xlu0 %1193
        %1197 = vset.pattern.permute.xlu0 0
        %1198 = vperm.xlu0 %1197, %v1180
        %v1199 = vpop.permute.xlu0 %1198
        %1202 = vset.pattern.permute.xlu0 0
        %1203 = vperm.xlu0 %1202, %v1181
        %v1204 = vpop.permute.xlu0 %1203
        %1207 = vset.pattern.permute.xlu0 0
        %1208 = vperm.xlu0 %1207, %v1182
        %v1209 = vpop.permute.xlu0 %1208
        %1212 = vset.pattern.permute.xlu0 0
        %1213 = vperm.xlu0 %1212, %v1183
        %v1214 = vpop.permute.xlu0 %1213
        %1217 = vset.pattern.permute.xlu0 0
        %1218 = vperm.xlu0 %1217, %v1184
        %v1219 = vpop.permute.xlu0 %1218
        %1222 = vset.pattern.permute.xlu0 0
        %1223 = vperm.xlu0 %1222, %v1185
        %v1224 = vpop.permute.xlu0 %1223
        %v1227 = vsel %vm541, %v1170, 0
        %v1230 = vsel %vm541, %v1171, 0
        %v1233 = vsel %vm541, %v1172, 0
        %v1236 = vsel %vm541, %v1173, 0
        %v1239 = vsel %vm541, %v1174, 0
        %v1242 = vsel %vm541, %v1175, 0
        %v1245 = vsel %vm541, %v1176, 0
        %v1248 = vsel %vm541, %v1177, 0
        %v1251 = vsel %vm566, %v1166, 0
        %v1254 = vsel %vm566, %v1167, 0
        %v1257 = vsel %vm566, %v1168, 0
        %v1260 = vsel %vm566, %v1169, 0
        %1262 = vmatpush.msra.mxu0 0.0
        %1263 = vmatpush.msra.mxu0 0.0
        %1264 = vmatpush.msra.mxu0 0.0
        %1265 = vmatpush.msra.mxu0 0.0
        %1266 = vmatpush.msra.mxu0 0.0
        %1267 = vmatpush.msra.mxu0 0.0
        %1268 = vmatpush.msra.mxu0 0.0
        %1269 = vmatpush.msra.mxu0 0.0
        %1270 = vmatpush.msra.mxu0 0.0
        %1271 = vmatpush.msra.mxu0 0.0
        %1272 = vmatpush.msra.mxu0 0.0
        %1273 = vmatpush.msra.mxu0 0.0
        %1274 = vmatpush.msra.mxu0 0.0
        %1275 = vmatpush.msra.mxu0 0.0
        %1276 = vmatpush.msra.mxu0 0.0
        %1277 = vmatpush.msra.mxu0 %v1251
        %1278 = vmatmul.f32.gmra.mxu0 %v1227
        %v1279 = vpop.f32.mrf.mxu0
        %v1280 = vadd.f32 %v1189, %v1279
        %1281 = vmatmul.f32.gmra.mxu0 %v1230
        %v1282 = vpop.f32.mrf.mxu0
        %v1283 = vadd.f32 %v1194, %v1282
        %1284 = vmatmul.f32.gmra.mxu0 %v1233
        %v1285 = vpop.f32.mrf.mxu0
        %v1286 = vadd.f32 %v1199, %v1285
        %1287 = vmatmul.f32.gmra.mxu0 %v1236
        %v1288 = vpop.f32.mrf.mxu0
        %v1289 = vadd.f32 %v1204, %v1288
        %1290 = vmatmul.f32.gmra.mxu0 %v1239
        %v1291 = vpop.f32.mrf.mxu0
        %v1292 = vadd.f32 %v1209, %v1291
        %1293 = vmatmul.f32.gmra.mxu0 %v1242
        %v1294 = vpop.f32.mrf.mxu0
        %v1295 = vadd.f32 %v1214, %v1294
        %1296 = vmatmul.f32.gmra.mxu0 %v1245
        %v1297 = vpop.f32.mrf.mxu0
        %v1298 = vadd.f32 %v1219, %v1297
        %1299 = vmatmul.f32.gmra.mxu0 %v1248
        %v1300 = vpop.f32.mrf.mxu0
        %v1301 = vadd.f32 %v1224, %v1300
        %1302 = vdwg.mxu0
        %1303 = vmatpush.msra.mxu0 0.0
        %1304 = vmatpush.msra.mxu0 0.0
        %1305 = vmatpush.msra.mxu0 0.0
        %1306 = vmatpush.msra.mxu0 0.0
        %1307 = vmatpush.msra.mxu0 0.0
        %1308 = vmatpush.msra.mxu0 0.0
        %1309 = vmatpush.msra.mxu0 0.0
        %1310 = vmatpush.msra.mxu0 0.0
        %1311 = vmatpush.msra.mxu0 0.0
        %1312 = vmatpush.msra.mxu0 0.0
        %1313 = vmatpush.msra.mxu0 0.0
        %1314 = vmatpush.msra.mxu0 0.0
        %1315 = vmatpush.msra.mxu0 0.0
        %1316 = vmatpush.msra.mxu0 0.0
        %1317 = vmatpush.msra.mxu0 0.0
        %1318 = vmatpush.msra.mxu0 %v1254
        %1319 = vmatmul.f32.gmra.mxu0 %v1227
        %v1320 = vpop.f32.mrf.mxu0
        %v1321 = vadd.f32 %v1189, %v1320
        %1322 = vmatmul.f32.gmra.mxu0 %v1230
        %v1323 = vpop.f32.mrf.mxu0
        %v1324 = vadd.f32 %v1194, %v1323
        %1325 = vmatmul.f32.gmra.mxu0 %v1233
        %v1326 = vpop.f32.mrf.mxu0
        %v1327 = vadd.f32 %v1199, %v1326
        %1328 = vmatmul.f32.gmra.mxu0 %v1236
        %v1329 = vpop.f32.mrf.mxu0
        %v1330 = vadd.f32 %v1204, %v1329
        %1331 = vmatmul.f32.gmra.mxu0 %v1239
        %v1332 = vpop.f32.mrf.mxu0
        %v1333 = vadd.f32 %v1209, %v1332
        %1334 = vmatmul.f32.gmra.mxu0 %v1242
        %v1335 = vpop.f32.mrf.mxu0
        %v1336 = vadd.f32 %v1214, %v1335
        %1337 = vmatmul.f32.gmra.mxu0 %v1245
        %v1338 = vpop.f32.mrf.mxu0
        %v1339 = vadd.f32 %v1219, %v1338
        %1340 = vmatmul.f32.gmra.mxu0 %v1248
        %v1341 = vpop.f32.mrf.mxu0
        %v1342 = vadd.f32 %v1224, %v1341
        %1343 = vdwg.mxu0
        %1344 = vmatpush.msra.mxu0 0.0
        %1345 = vmatpush.msra.mxu0 0.0
        %1346 = vmatpush.msra.mxu0 0.0
        %1347 = vmatpush.msra.mxu0 0.0
        %1348 = vmatpush.msra.mxu0 0.0
        %1349 = vmatpush.msra.mxu0 0.0
        %1350 = vmatpush.msra.mxu0 0.0
        %1351 = vmatpush.msra.mxu0 0.0
        %1352 = vmatpush.msra.mxu0 0.0
        %1353 = vmatpush.msra.mxu0 0.0
        %1354 = vmatpush.msra.mxu0 0.0
        %1355 = vmatpush.msra.mxu0 0.0
        %1356 = vmatpush.msra.mxu0 0.0
        %1357 = vmatpush.msra.mxu0 0.0
        %1358 = vmatpush.msra.mxu0 0.0
        %1359 = vmatpush.msra.mxu0 %v1257
        %1360 = vmatmul.f32.gmra.mxu0 %v1227
        %v1361 = vpop.f32.mrf.mxu0
        %v1362 = vadd.f32 %v1189, %v1361
        %1363 = vmatmul.f32.gmra.mxu0 %v1230
        %v1364 = vpop.f32.mrf.mxu0
        %v1365 = vadd.f32 %v1194, %v1364
        %1366 = vmatmul.f32.gmra.mxu0 %v1233
        %v1367 = vpop.f32.mrf.mxu0
        %v1368 = vadd.f32 %v1199, %v1367
        %1369 = vmatmul.f32.gmra.mxu0 %v1236
        %v1370 = vpop.f32.mrf.mxu0
        %v1371 = vadd.f32 %v1204, %v1370
        %1372 = vmatmul.f32.gmra.mxu0 %v1239
        %v1373 = vpop.f32.mrf.mxu0
        %v1374 = vadd.f32 %v1209, %v1373
        %1375 = vmatmul.f32.gmra.mxu0 %v1242
        %v1376 = vpop.f32.mrf.mxu0
        %v1377 = vadd.f32 %v1214, %v1376
        %1378 = vmatmul.f32.gmra.mxu0 %v1245
        %v1379 = vpop.f32.mrf.mxu0
        %v1380 = vadd.f32 %v1219, %v1379
        %1381 = vmatmul.f32.gmra.mxu0 %v1248
        %v1382 = vpop.f32.mrf.mxu0
        %v1383 = vadd.f32 %v1224, %v1382
        %1384 = vdwg.mxu0
        %1385 = vmatpush.msra.mxu0 0.0
        %1386 = vmatpush.msra.mxu0 0.0
        %1387 = vmatpush.msra.mxu0 0.0
        %1388 = vmatpush.msra.mxu0 0.0
        %1389 = vmatpush.msra.mxu0 0.0
        %1390 = vmatpush.msra.mxu0 0.0
        %1391 = vmatpush.msra.mxu0 0.0
        %1392 = vmatpush.msra.mxu0 0.0
        %1393 = vmatpush.msra.mxu0 0.0
        %1394 = vmatpush.msra.mxu0 0.0
        %1395 = vmatpush.msra.mxu0 0.0
        %1396 = vmatpush.msra.mxu0 0.0
        %1397 = vmatpush.msra.mxu0 0.0
        %1398 = vmatpush.msra.mxu0 0.0
        %1399 = vmatpush.msra.mxu0 0.0
        %1400 = vmatpush.msra.mxu0 %v1260
        %1401 = vmatmul.f32.gmra.mxu0 %v1227
        %v1402 = vpop.f32.mrf.mxu0
        %v1403 = vadd.f32 %v1189, %v1402
        %1404 = vmatmul.f32.gmra.mxu0 %v1230
        %v1405 = vpop.f32.mrf.mxu0
        %v1406 = vadd.f32 %v1194, %v1405
        %1407 = vmatmul.f32.gmra.mxu0 %v1233
        %v1408 = vpop.f32.mrf.mxu0
        %v1409 = vadd.f32 %v1199, %v1408
        %1410 = vmatmul.f32.gmra.mxu0 %v1236
        %v1411 = vpop.f32.mrf.mxu0
        %v1412 = vadd.f32 %v1204, %v1411
        %1413 = vmatmul.f32.gmra.mxu0 %v1239
        %v1414 = vpop.f32.mrf.mxu0
        %v1415 = vadd.f32 %v1209, %v1414
        %1416 = vmatmul.f32.gmra.mxu0 %v1242
        %v1417 = vpop.f32.mrf.mxu0
        %v1418 = vadd.f32 %v1214, %v1417
        %1419 = vmatmul.f32.gmra.mxu0 %v1245
        %v1420 = vpop.f32.mrf.mxu0
        %v1421 = vadd.f32 %v1219, %v1420
        %1422 = vmatmul.f32.gmra.mxu0 %v1248
        %v1423 = vpop.f32.mrf.mxu0
        %v1424 = vadd.f32 %v1224, %v1423
        %1425 = vdwg.mxu0
        %v1426 = vtanh.pop %v1280
        %v1427 = vtanh.pop %v1321
        %v1428 = vtanh.pop %v1362
        %v1429 = vtanh.pop %v1403
        %v1430 = vtanh.pop %v1283
        %v1431 = vtanh.pop %v1324
        %v1432 = vtanh.pop %v1365
        %v1433 = vtanh.pop %v1406
        %v1434 = vtanh.pop %v1286
        %v1435 = vtanh.pop %v1327
        %v1436 = vtanh.pop %v1368
        %v1437 = vtanh.pop %v1409
        %v1438 = vtanh.pop %v1289
        %v1439 = vtanh.pop %v1330
        %v1440 = vtanh.pop %v1371
        %v1441 = vtanh.pop %v1412
        %v1442 = vtanh.pop %v1292
        %v1443 = vtanh.pop %v1333
        %v1444 = vtanh.pop %v1374
        %v1445 = vtanh.pop %v1415
        %v1446 = vtanh.pop %v1295
        %v1447 = vtanh.pop %v1336
        %v1448 = vtanh.pop %v1377
        %v1449 = vtanh.pop %v1418
        %v1450 = vtanh.pop %v1298
        %v1451 = vtanh.pop %v1339
        %v1452 = vtanh.pop %v1380
        %v1453 = vtanh.pop %v1421
        %v1454 = vtanh.pop %v1301
        %v1455 = vtanh.pop %v1342
        %v1456 = vtanh.pop %v1383
        %v1457 = vtanh.pop %v1424
        %v1458 = vld [vmem:[%s9] sm:$0xff]
        %v1459 = vld [vmem:[%s9 + $0x8] sm:$0xff]
        %v1460 = vld [vmem:[%s9 + $0x10] sm:$0xff]
        %v1461 = vld [vmem:[%s9 + $0x18] sm:$0xff]
        %v1462 = vld [vmem:[%s9 + $0x20] sm:$0xff]
        %v1463 = vld [vmem:[%s9 + $0x28] sm:$0xff]
        %v1464 = vld [vmem:[%s9 + $0x30] sm:$0xff]
        %v1465 = vld [vmem:[%s9 + $0x38] sm:$0xff]
        %v1466 = vld [vmem:[%s10] sm:$0xff]
        %v1467 = vld [vmem:[%s10 + $0x8] sm:$0xff]
        %v1468 = vld [vmem:[%s10 + $0x10] sm:$0xff]
        %v1469 = vld [vmem:[%s10 + $0x18] sm:$0xff]
        %v1470 = vld [vmem:[%s10 + $0x20] sm:$0xff]
        %v1471 = vld [vmem:[%s10 + $0x28] sm:$0xff]
        %v1472 = vld [vmem:[%s10 + $0x30] sm:$0xff]
        %v1473 = vld [vmem:[%s10 + $0x38] sm:$0xff]
        %1475 = vset.pattern.permute.xlu0 0
        %1476 = vperm.xlu0 %1475, %v1466
        %v1477 = vpop.permute.xlu0 %1476
        %1480 = vset.pattern.permute.xlu0 0
        %1481 = vperm.xlu0 %1480, %v1467
        %v1482 = vpop.permute.xlu0 %1481
        %1485 = vset.pattern.permute.xlu0 0
        %1486 = vperm.xlu0 %1485, %v1468
        %v1487 = vpop.permute.xlu0 %1486
        %1490 = vset.pattern.permute.xlu0 0
        %1491 = vperm.xlu0 %1490, %v1469
        %v1492 = vpop.permute.xlu0 %1491
        %1495 = vset.pattern.permute.xlu0 0
        %1496 = vperm.xlu0 %1495, %v1470
        %v1497 = vpop.permute.xlu0 %1496
        %1500 = vset.pattern.permute.xlu0 0
        %1501 = vperm.xlu0 %1500, %v1471
        %v1502 = vpop.permute.xlu0 %1501
        %1505 = vset.pattern.permute.xlu0 0
        %1506 = vperm.xlu0 %1505, %v1472
        %v1507 = vpop.permute.xlu0 %1506
        %1510 = vset.pattern.permute.xlu0 0
        %1511 = vperm.xlu0 %1510, %v1473
        %v1512 = vpop.permute.xlu0 %1511
        %v1515 = vsel %vm831, %v1458, 0
        %v1518 = vsel %vm831, %v1459, 0
        %v1521 = vsel %vm831, %v1460, 0
        %v1524 = vsel %vm831, %v1461, 0
        %v1527 = vsel %vm831, %v1462, 0
        %v1530 = vsel %vm831, %v1463, 0
        %v1533 = vsel %vm831, %v1464, 0
        %v1536 = vsel %vm831, %v1465, 0
        %1538 = vmatpush.msra.mxu0 0.0
        %1539 = vmatpush.msra.mxu0 0.0
        %1540 = vmatpush.msra.mxu0 0.0
        %1541 = vmatpush.msra.mxu0 0.0
        %1542 = vmatpush.msra.mxu0 0.0
        %1543 = vmatpush.msra.mxu0 0.0
        %1544 = vmatpush.msra.mxu0 0.0
        %1545 = vmatpush.msra.mxu0 0.0
        %1546 = vmatpush.msra.mxu0 %v1454
        %1547 = vmatpush.msra.mxu0 %v1450
        %1548 = vmatpush.msra.mxu0 %v1446
        %1549 = vmatpush.msra.mxu0 %v1442
        %1550 = vmatpush.msra.mxu0 %v1438
        %1551 = vmatpush.msra.mxu0 %v1434
        %1552 = vmatpush.msra.mxu0 %v1430
        %1553 = vmatpush.msra.mxu0 %v1426
        %1554 = vmatmul.f32.gmra.mxu0 %v1515
        %v1555 = vpop.f32.mrf.mxu0
        %v1556 = vadd.f32 %v1477, %v1555
        %1557 = vmatmul.f32.gmra.mxu0 %v1518
        %v1558 = vpop.f32.mrf.mxu0
        %v1559 = vadd.f32 %v1482, %v1558
        %1560 = vmatmul.f32.gmra.mxu0 %v1521
        %v1561 = vpop.f32.mrf.mxu0
        %v1562 = vadd.f32 %v1487, %v1561
        %1563 = vmatmul.f32.gmra.mxu0 %v1524
        %v1564 = vpop.f32.mrf.mxu0
        %v1565 = vadd.f32 %v1492, %v1564
        %1566 = vmatmul.f32.gmra.mxu0 %v1527
        %v1567 = vpop.f32.mrf.mxu0
        %v1568 = vadd.f32 %v1497, %v1567
        %1569 = vmatmul.f32.gmra.mxu0 %v1530
        %v1570 = vpop.f32.mrf.mxu0
        %v1571 = vadd.f32 %v1502, %v1570
        %1572 = vmatmul.f32.gmra.mxu0 %v1533
        %v1573 = vpop.f32.mrf.mxu0
        %v1574 = vadd.f32 %v1507, %v1573
        %1575 = vmatmul.f32.gmra.mxu0 %v1536
        %v1576 = vpop.f32.mrf.mxu0
        %v1577 = vadd.f32 %v1512, %v1576
        %1578 = vdwg.mxu0
        %1579 = vmatpush.msra.mxu0 0.0
        %1580 = vmatpush.msra.mxu0 0.0
        %1581 = vmatpush.msra.mxu0 0.0
        %1582 = vmatpush.msra.mxu0 0.0
        %1583 = vmatpush.msra.mxu0 0.0
        %1584 = vmatpush.msra.mxu0 0.0
        %1585 = vmatpush.msra.mxu0 0.0
        %1586 = vmatpush.msra.mxu0 0.0
        %1587 = vmatpush.msra.mxu0 %v1455
        %1588 = vmatpush.msra.mxu0 %v1451
        %1589 = vmatpush.msra.mxu0 %v1447
        %1590 = vmatpush.msra.mxu0 %v1443
        %1591 = vmatpush.msra.mxu0 %v1439
        %1592 = vmatpush.msra.mxu0 %v1435
        %1593 = vmatpush.msra.mxu0 %v1431
        %1594 = vmatpush.msra.mxu0 %v1427
        %1595 = vmatmul.f32.gmra.mxu0 %v1515
        %v1596 = vpop.f32.mrf.mxu0
        %v1597 = vadd.f32 %v1477, %v1596
        %1598 = vmatmul.f32.gmra.mxu0 %v1518
        %v1599 = vpop.f32.mrf.mxu0
        %v1600 = vadd.f32 %v1482, %v1599
        %1601 = vmatmul.f32.gmra.mxu0 %v1521
        %v1602 = vpop.f32.mrf.mxu0
        %v1603 = vadd.f32 %v1487, %v1602
        %1604 = vmatmul.f32.gmra.mxu0 %v1524
        %v1605 = vpop.f32.mrf.mxu0
        %v1606 = vadd.f32 %v1492, %v1605
        %1607 = vmatmul.f32.gmra.mxu0 %v1527
        %v1608 = vpop.f32.mrf.mxu0
        %v1609 = vadd.f32 %v1497, %v1608
        %1610 = vmatmul.f32.gmra.mxu0 %v1530
        %v1611 = vpop.f32.mrf.mxu0
        %v1612 = vadd.f32 %v1502, %v1611
        %1613 = vmatmul.f32.gmra.mxu0 %v1533
        %v1614 = vpop.f32.mrf.mxu0
        %v1615 = vadd.f32 %v1507, %v1614
        %1616 = vmatmul.f32.gmra.mxu0 %v1536
        %v1617 = vpop.f32.mrf.mxu0
        %v1618 = vadd.f32 %v1512, %v1617
        %1619 = vdwg.mxu0
        %1620 = vmatpush.msra.mxu0 0.0
        %1621 = vmatpush.msra.mxu0 0.0
        %1622 = vmatpush.msra.mxu0 0.0
        %1623 = vmatpush.msra.mxu0 0.0
        %1624 = vmatpush.msra.mxu0 0.0
        %1625 = vmatpush.msra.mxu0 0.0
        %1626 = vmatpush.msra.mxu0 0.0
        %1627 = vmatpush.msra.mxu0 0.0
        %1628 = vmatpush.msra.mxu0 %v1456
        %1629 = vmatpush.msra.mxu0 %v1452
        %1630 = vmatpush.msra.mxu0 %v1448
        %1631 = vmatpush.msra.mxu0 %v1444
        %1632 = vmatpush.msra.mxu0 %v1440
        %1633 = vmatpush.msra.mxu0 %v1436
        %1634 = vmatpush.msra.mxu0 %v1432
        %1635 = vmatpush.msra.mxu0 %v1428
        %1636 = vmatmul.f32.gmra.mxu0 %v1515
        %v1637 = vpop.f32.mrf.mxu0
        %v1638 = vadd.f32 %v1477, %v1637
        %1639 = vmatmul.f32.gmra.mxu0 %v1518
        %v1640 = vpop.f32.mrf.mxu0
        %v1641 = vadd.f32 %v1482, %v1640
        %1642 = vmatmul.f32.gmra.mxu0 %v1521
        %v1643 = vpop.f32.mrf.mxu0
        %v1644 = vadd.f32 %v1487, %v1643
        %1645 = vmatmul.f32.gmra.mxu0 %v1524
        %v1646 = vpop.f32.mrf.mxu0
        %v1647 = vadd.f32 %v1492, %v1646
        %1648 = vmatmul.f32.gmra.mxu0 %v1527
        %v1649 = vpop.f32.mrf.mxu0
        %v1650 = vadd.f32 %v1497, %v1649
        %1651 = vmatmul.f32.gmra.mxu0 %v1530
        %v1652 = vpop.f32.mrf.mxu0
        %v1653 = vadd.f32 %v1502, %v1652
        %1654 = vmatmul.f32.gmra.mxu0 %v1533
        %v1655 = vpop.f32.mrf.mxu0
        %v1656 = vadd.f32 %v1507, %v1655
        %1657 = vmatmul.f32.gmra.mxu0 %v1536
        %v1658 = vpop.f32.mrf.mxu0
        %v1659 = vadd.f32 %v1512, %v1658
        %1660 = vdwg.mxu0
        %1661 = vmatpush.msra.mxu0 0.0
        %1662 = vmatpush.msra.mxu0 0.0
        %1663 = vmatpush.msra.mxu0 0.0
        %1664 = vmatpush.msra.mxu0 0.0
        %1665 = vmatpush.msra.mxu0 0.0
        %1666 = vmatpush.msra.mxu0 0.0
        %1667 = vmatpush.msra.mxu0 0.0
        %1668 = vmatpush.msra.mxu0 0.0
        %1669 = vmatpush.msra.mxu0 %v1457
        %1670 = vmatpush.msra.mxu0 %v1453
        %1671 = vmatpush.msra.mxu0 %v1449
        %1672 = vmatpush.msra.mxu0 %v1445
        %1673 = vmatpush.msra.mxu0 %v1441
        %1674 = vmatpush.msra.mxu0 %v1437
        %1675 = vmatpush.msra.mxu0 %v1433
        %1676 = vmatpush.msra.mxu0 %v1429
        %1677 = vmatmul.f32.gmra.mxu0 %v1515
        %v1678 = vpop.f32.mrf.mxu0
        %v1679 = vadd.f32 %v1477, %v1678
        %1680 = vmatmul.f32.gmra.mxu0 %v1518
        %v1681 = vpop.f32.mrf.mxu0
        %v1682 = vadd.f32 %v1482, %v1681
        %1683 = vmatmul.f32.gmra.mxu0 %v1521
        %v1684 = vpop.f32.mrf.mxu0
        %v1685 = vadd.f32 %v1487, %v1684
        %1686 = vmatmul.f32.gmra.mxu0 %v1524
        %v1687 = vpop.f32.mrf.mxu0
        %v1688 = vadd.f32 %v1492, %v1687
        %1689 = vmatmul.f32.gmra.mxu0 %v1527
        %v1690 = vpop.f32.mrf.mxu0
        %v1691 = vadd.f32 %v1497, %v1690
        %1692 = vmatmul.f32.gmra.mxu0 %v1530
        %v1693 = vpop.f32.mrf.mxu0
        %v1694 = vadd.f32 %v1502, %v1693
        %1695 = vmatmul.f32.gmra.mxu0 %v1533
        %v1696 = vpop.f32.mrf.mxu0
        %v1697 = vadd.f32 %v1507, %v1696
        %1698 = vmatmul.f32.gmra.mxu0 %v1536
        %v1699 = vpop.f32.mrf.mxu0
        %v1700 = vadd.f32 %v1512, %v1699
        %1701 = vdwg.mxu0
        %v1702 = vtanh.pop %v1556
        %v1703 = vtanh.pop %v1597
        %v1704 = vtanh.pop %v1638
        %v1705 = vtanh.pop %v1679
        %v1706 = vtanh.pop %v1559
        %v1707 = vtanh.pop %v1600
        %v1708 = vtanh.pop %v1641
        %v1709 = vtanh.pop %v1682
        %v1710 = vtanh.pop %v1562
        %v1711 = vtanh.pop %v1603
        %v1712 = vtanh.pop %v1644
        %v1713 = vtanh.pop %v1685
        %v1714 = vtanh.pop %v1565
        %v1715 = vtanh.pop %v1606
        %v1716 = vtanh.pop %v1647
        %v1717 = vtanh.pop %v1688
        %v1718 = vtanh.pop %v1568
        %v1719 = vtanh.pop %v1609
        %v1720 = vtanh.pop %v1650
        %v1721 = vtanh.pop %v1691
        %v1722 = vtanh.pop %v1571
        %v1723 = vtanh.pop %v1612
        %v1724 = vtanh.pop %v1653
        %v1725 = vtanh.pop %v1694
        %v1726 = vtanh.pop %v1574
        %v1727 = vtanh.pop %v1615
        %v1728 = vtanh.pop %v1656
        %v1729 = vtanh.pop %v1697
        %v1730 = vtanh.pop %v1577
        %v1731 = vtanh.pop %v1618
        %v1732 = vtanh.pop %v1659
        %v1733 = vtanh.pop %v1700
        %v1734 = vld [vmem:[%s11] sm:$0xff]
        %v1735 = vld [vmem:[%s12] sm:$0xff]
        %1737 = vset.pattern.permute.xlu0 0
        %1738 = vperm.xlu0 %1737, %v1735
        %v1739 = vpop.permute.xlu0 %1738
        %v1742 = vsel %vm831, %v1734, 0
        %1744 = vmatpush.msra.mxu0 0.0
        %1745 = vmatpush.msra.mxu0 0.0
        %1746 = vmatpush.msra.mxu0 0.0
        %1747 = vmatpush.msra.mxu0 0.0
        %1748 = vmatpush.msra.mxu0 0.0
        %1749 = vmatpush.msra.mxu0 0.0
        %1750 = vmatpush.msra.mxu0 0.0
        %1751 = vmatpush.msra.mxu0 0.0
        %1752 = vmatpush.msra.mxu0 %v1730
        %1753 = vmatpush.msra.mxu0 %v1726
        %1754 = vmatpush.msra.mxu0 %v1722
        %1755 = vmatpush.msra.mxu0 %v1718
        %1756 = vmatpush.msra.mxu0 %v1714
        %1757 = vmatpush.msra.mxu0 %v1710
        %1758 = vmatpush.msra.mxu0 %v1706
        %1759 = vmatpush.msra.mxu0 %v1702
        %1760 = vmatmul.f32.gmra.mxu0 %v1742
        %v1761 = vpop.f32.mrf.mxu0
        %v1762 = vadd.f32 %v1739, %v1761
        %1763 = vdwg.mxu0
        %1764 = vmatpush.msra.mxu0 0.0
        %1765 = vmatpush.msra.mxu0 0.0
        %1766 = vmatpush.msra.mxu0 0.0
        %1767 = vmatpush.msra.mxu0 0.0
        %1768 = vmatpush.msra.mxu0 0.0
        %1769 = vmatpush.msra.mxu0 0.0
        %1770 = vmatpush.msra.mxu0 0.0
        %1771 = vmatpush.msra.mxu0 0.0
        %1772 = vmatpush.msra.mxu0 %v1731
        %1773 = vmatpush.msra.mxu0 %v1727
        %1774 = vmatpush.msra.mxu0 %v1723
        %1775 = vmatpush.msra.mxu0 %v1719
        %1776 = vmatpush.msra.mxu0 %v1715
        %1777 = vmatpush.msra.mxu0 %v1711
        %1778 = vmatpush.msra.mxu0 %v1707
        %1779 = vmatpush.msra.mxu0 %v1703
        %1780 = vmatmul.f32.gmra.mxu0 %v1742
        %v1781 = vpop.f32.mrf.mxu0
        %v1782 = vadd.f32 %v1739, %v1781
        %1783 = vdwg.mxu0
        %1784 = vmatpush.msra.mxu0 0.0
        %1785 = vmatpush.msra.mxu0 0.0
        %1786 = vmatpush.msra.mxu0 0.0
        %1787 = vmatpush.msra.mxu0 0.0
        %1788 = vmatpush.msra.mxu0 0.0
        %1789 = vmatpush.msra.mxu0 0.0
        %1790 = vmatpush.msra.mxu0 0.0
        %1791 = vmatpush.msra.mxu0 0.0
        %1792 = vmatpush.msra.mxu0 %v1732
        %1793 = vmatpush.msra.mxu0 %v1728
        %1794 = vmatpush.msra.mxu0 %v1724
        %1795 = vmatpush.msra.mxu0 %v1720
        %1796 = vmatpush.msra.mxu0 %v1716
        %1797 = vmatpush.msra.mxu0 %v1712
        %1798 = vmatpush.msra.mxu0 %v1708
        %1799 = vmatpush.msra.mxu0 %v1704
        %1800 = vmatmul.f32.gmra.mxu0 %v1742
        %v1801 = vpop.f32.mrf.mxu0
        %v1802 = vadd.f32 %v1739, %v1801
        %1803 = vdwg.mxu0
        %1804 = vmatpush.msra.mxu0 0.0
        %1805 = vmatpush.msra.mxu0 0.0
        %1806 = vmatpush.msra.mxu0 0.0
        %1807 = vmatpush.msra.mxu0 0.0
        %1808 = vmatpush.msra.mxu0 0.0
        %1809 = vmatpush.msra.mxu0 0.0
        %1810 = vmatpush.msra.mxu0 0.0
        %1811 = vmatpush.msra.mxu0 0.0
        %1812 = vmatpush.msra.mxu0 %v1733
        %1813 = vmatpush.msra.mxu0 %v1729
        %1814 = vmatpush.msra.mxu0 %v1725
        %1815 = vmatpush.msra.mxu0 %v1721
        %1816 = vmatpush.msra.mxu0 %v1717
        %1817 = vmatpush.msra.mxu0 %v1713
        %1818 = vmatpush.msra.mxu0 %v1709
        %1819 = vmatpush.msra.mxu0 %v1705
        %1820 = vmatmul.f32.gmra.mxu0 %v1742
        %v1821 = vpop.f32.mrf.mxu0
        %v1822 = vadd.f32 %v1739, %v1821
        %1823 = vdwg.mxu0
        %v1824 = vmul.f32 %v1762, 1.442695
        %v1825 = vpow.pop %v1824
        %v1826 = vmul.f32 %v1782, 1.442695
        %v1827 = vpow.pop %v1826
        %v1828 = vmul.f32 %v1802, 1.442695
        %v1829 = vpow.pop %v1828
        %v1830 = vmul.f32 %v1822, 1.442695
        %v1831 = vpow.pop %v1830
        %v1836 = vrot.slane %v1825, 4
        %v1837 = vrot.slane %v1827, 4
        %v1838 = vrot.slane %v1829, 4
        %v1839 = vrot.slane %v1831, 4
        %v1844 = vmul.f32 %v481, %v1836
        %v1845 = vmul.f32 %v482, %v1837
        %v1846 = vmul.f32 %v483, %v1838
        %v1847 = vmul.f32 %v484, %v1839
        %v1848 = vadd.f32 %v1762, %v1844
        %v1849 = vadd.f32 %v1782, %v1845
        %v1850 = vadd.f32 %v1802, %v1846
        %v1851 = vadd.f32 %v1822, %v1847
        %1852 = vst [vmem:[%s465] sm:$0xf] %v1848
        %1853 = vst [vmem:[%s465 + $0x8] sm:$0xf] %v1849
        %1854 = vst [vmem:[%s465 + $0x10] sm:$0xf] %v1850
        %1855 = vst [vmem:[%s465 + $0x18] sm:$0xf] %v1851
        %v1856 = vrot.slane %v1166, 4
        %v1857 = vrot.slane %v1167, 4
        %v1858 = vrot.slane %v1168, 4
        %v1859 = vrot.slane %v1169, 4
        %1864 = vst [vmem:[%s465] sm:$0xf0] %v1856
        %1865 = vst [vmem:[%s465 + $0x8] sm:$0xf0] %v1857
        %1866 = vst [vmem:[%s465 + $0x10] sm:$0xf0] %v1858
        %1867 = vst [vmem:[%s465 + $0x18] sm:$0xf0] %v1859
        %v1872 = vrot.slane %v1080, 4
        %v1873 = vrot.slane %v1100, 4
        %v1874 = vrot.slane %v1120, 4
        %v1875 = vrot.slane %v1140, 4
        %v1880 = vsel %vm566, %v1872, 0.0
        %v1881 = vrot.slane %v1880, 4
        %v1882 = vadd.f32 %v1880, %v1881
        %v1883 = vrot.slane %v1882, 2
        %v1884 = vadd.f32 %v1882, %v1883
        %v1885 = vrot.slane %v1884, 1
        %v1886 = vadd.f32 %v1884, %v1885
        %v1887 = vsel %vm566, %v1873, 0.0
        %v1888 = vrot.slane %v1887, 4
        %v1889 = vadd.f32 %v1887, %v1888
        %v1890 = vrot.slane %v1889, 2
        %v1891 = vadd.f32 %v1889, %v1890
        %v1892 = vrot.slane %v1891, 1
        %v1893 = vadd.f32 %v1891, %v1892
        %v1894 = vsel %vm566, %v1874, 0.0
        %v1895 = vrot.slane %v1894, 4
        %v1896 = vadd.f32 %v1894, %v1895
        %v1897 = vrot.slane %v1896, 2
        %v1898 = vadd.f32 %v1896, %v1897
        %v1899 = vrot.slane %v1898, 1
        %v1900 = vadd.f32 %v1898, %v1899
        %v1901 = vsel %vm566, %v1875, 0.0
        %v1902 = vrot.slane %v1901, 4
        %v1903 = vadd.f32 %v1901, %v1902
        %v1904 = vrot.slane %v1903, 2
        %v1905 = vadd.f32 %v1903, %v1904
        %v1906 = vrot.slane %v1905, 1
        %v1907 = vadd.f32 %v1905, %v1906
        %v1912 = vrot.slane %v1762, 4
        %v1913 = vrot.slane %v1782, 4
        %v1914 = vrot.slane %v1802, 4
        %v1915 = vrot.slane %v1822, 4
        %v1920 = vsel %vm566, %v1912, 0.0
        %v1921 = vrot.slane %v1920, 4
        %v1922 = vadd.f32 %v1920, %v1921
        %v1923 = vrot.slane %v1922, 2
        %v1924 = vadd.f32 %v1922, %v1923
        %v1925 = vrot.slane %v1924, 1
        %v1926 = vadd.f32 %v1924, %v1925
        %v1927 = vsel %vm566, %v1913, 0.0
        %v1928 = vrot.slane %v1927, 4
        %v1929 = vadd.f32 %v1927, %v1928
        %v1930 = vrot.slane %v1929, 2
        %v1931 = vadd.f32 %v1929, %v1930
        %v1932 = vrot.slane %v1931, 1
        %v1933 = vadd.f32 %v1931, %v1932
        %v1934 = vsel %vm566, %v1914, 0.0
        %v1935 = vrot.slane %v1934, 4
        %v1936 = vadd.f32 %v1934, %v1935
        %v1937 = vrot.slane %v1936, 2
        %v1938 = vadd.f32 %v1936, %v1937
        %v1939 = vrot.slane %v1938, 1
        %v1940 = vadd.f32 %v1938, %v1939
        %v1941 = vsel %vm566, %v1915, 0.0
        %v1942 = vrot.slane %v1941, 4
        %v1943 = vadd.f32 %v1941, %v1942
        %v1944 = vrot.slane %v1943, 2
        %v1945 = vadd.f32 %v1943, %v1944
        %v1946 = vrot.slane %v1945, 1
        %v1947 = vadd.f32 %v1945, %v1946
        %v1948 = vadd.f32 %v1886, %v1926
        %v1949 = vadd.f32 %v1893, %v1933
        %v1950 = vadd.f32 %v1900, %v1940
        %v1951 = vadd.f32 %v1907, %v1947
        %v1956 = vrot.slane %v1949, 7
        %v1957 = vrot.slane %v1950, 6
        %v1958 = vrot.slane %v1951, 5
        %vm1959 = vcmask 1040384
        %v1960 = vsel %vm1959, %v1948, %v1956
        %vm1961 = vcmask 1042434
        %v1962 = vsel %vm1961, %v1957, %v1958
        %vm1963 = vcmask 1041408
        %v1964 = vsel %vm1963, %v1960, %v1962
        %v1966 = vlaneseq
        %vm1967 = vcmp.ge.s32.totalorder %v1966, 0
        %vm1968 = vcmp.lt.s32.totalorder %v1966, 512
        %vm1969 = vmand %vm1967, %vm1968
        %1970 = vst.msk [vmem:[%s472] sm:$0xf] %vm1969, %v1964
        %s1971 = sand.u32 %s318, 1
        %s1972 = scalar_lea.sflag [#allocation3], %s1971
        %s1973 = sand.u32 %s318, 1
        %s1974 = smul.addr %s1973, 32
        %s1975 = scalar_lea.vmem [#allocation2], %s1974
        %s1976 = sand.u32 %s344, 1
        %s1977 = scalar_lea.sflag [#allocation5], %s1976
        %s1978 = sand.u32 %s344, 1
        %s1979 = smul.addr %s1978, 4
        %s1980 = scalar_lea.vmem [#allocation4], %s1979
        // Predicated region
        $region73: #{tpu_custom_call.1} parent=71 // pred_check
          %p1981 = pneg %p328
        $region74: #{tpu_custom_call.1} parent=71 // pred_check_branch
          %1983 = sbr.rel (%p1981) target = $region76
        $region75: #{tpu_custom_call.1} parent=71 // pred_region
          %s1984 = smul.u32 4, %s32
          %1986 = vsyncadd %s1972, 0
          %s1987 = smul.addr %s1984, 8
          %s1988 = scalar_lea.hbm %s13, %s1987
          %s1990 = sshll.u32 %s1975, 4
          %s1991 = int_to_ptr.vmem [resolvable:$true] %s1990
          %s1992 = sshll.u32 %s1988, 4
          %s1993 = int_to_ptr.hbm [resolvable:$true] %s1992
          %1995 = dma.vmem_to_hbm [thread:$0]  %s1991, 512, %s1993, %s1972
        $region76: #{tpu_custom_call.1} parent=71 // pred_fallthru
          _
        // Predicated region
        $region77: #{tpu_custom_call.1} parent=71 // pred_check
          %p1996 = pneg %p354
        $region78: #{tpu_custom_call.1} parent=71 // pred_check_branch
          %1998 = sbr.rel (%p1996) target = $region80
        $region79: #{tpu_custom_call.1} parent=71 // pred_region
          %s1999 = smul.u32 4, %s32
          %2001 = vsyncadd %s1977, 0
          %s2002 = scalar_lea.hbm %s14, %s1999
          %s2004 = sshll.u32 %s1980, 4
          %s2005 = int_to_ptr.vmem [resolvable:$true] %s2004
          %s2006 = sshll.u32 %s2002, 4
          %s2007 = int_to_ptr.hbm [resolvable:$true] %s2006
          %2009 = dma.vmem_to_hbm [thread:$0]  %s2005, 64, %s2007, %s1977
        $region80: #{tpu_custom_call.1} parent=71 // pred_fallthru
          _
      $region72: #{tpu_custom_call.1} parent=5 // pred_fallthru
        _
      %p2010 = scmp.le.s32.totalorder 2, %s27
      // Predicated region
      $region81: #{tpu_custom_call.1} parent=5 // pred_check
        %p2011 = pneg %p2010
      $region82: #{tpu_custom_call.1} parent=5 // pred_check_branch
        %2013 = sbr.rel (%p2011) target = $region84
      $region83: #{tpu_custom_call.1} parent=5 // pred_region
        %s2014 = ssub.s32 %s27, 2
        // Predicated region
        $region85: #{tpu_custom_call.1} parent=83 // pred_check
          %p2015 = pneg %p334
        $region86: #{tpu_custom_call.1} parent=83 // pred_check_branch
          %2017 = sbr.rel (%p2015) target = $region88
        $region87: #{tpu_custom_call.1} parent=83 // pred_region
          %s2018 = sand.u32 %s319, 1
          %s2019 = scalar_lea.sflag [#allocation3], %s2018
          %s2020 = sand.u32 %s319, 1
          %s2021 = smul.addr %s2020, 32
          %s2022 = scalar_lea.vmem [#allocation2], %s2021
          %2024 = dma.done %s2019, 512
        $region88: #{tpu_custom_call.1} parent=83 // pred_fallthru
          _
        // Predicated region
        $region89: #{tpu_custom_call.1} parent=83 // pred_check
          %p2025 = pneg %p360
        $region90: #{tpu_custom_call.1} parent=83 // pred_check_branch
          %2027 = sbr.rel (%p2025) target = $region92
        $region91: #{tpu_custom_call.1} parent=83 // pred_region
          %s2028 = sand.u32 %s345, 1
          %s2029 = scalar_lea.sflag [#allocation5], %s2028
          %s2030 = sand.u32 %s345, 1
          %s2031 = smul.addr %s2030, 4
          %s2032 = scalar_lea.vmem [#allocation4], %s2031
          %2034 = dma.done %s2029, 64
        $region92: #{tpu_custom_call.1} parent=83 // pred_fallthru
          _
      $region84: #{tpu_custom_call.1} parent=5 // pred_fallthru
        _
    $region6: #{tpu_custom_call.1} parent=1 // loop_footer
      %s31 = sadd.s32 1, %s27
    $region7: #{tpu_custom_call.1} parent=1 // loop_footer_branch
      %26 = sbr.rel target = $region3
    $region8: #{tpu_custom_call.1} parent=1 // loop_exit
      _
    %2035 = vsyncpa [#allocation3], 1
    %s2036 = scalar_lea.sflag [#allocation3], 1
    %2037 = vsyncpa %s2036, 1
    %2038 = vsyncpa [#allocation5], 1
    %s2039 = scalar_lea.sflag [#allocation5], 1
    %2040 = vsyncpa %s2039, 1

</llo_original>
